<compile_context>
chip_gen: v5e
topology: v5e:2x2
jax: 0.10.0
libtpu: 0.0.40
codegen_flags: <defaults>
</compile_context>

<pallas_src>
import functools
import numpy as np
import jax
import jax.numpy as jnp
from jax.experimental import pallas as pl
from jax.experimental.pallas import tpu as pltpu

# ---------------- model hyper-params (ppo_gen_5) ----------------
N_PLAYER = 4
N_CARD = 33
N_ACTION = 2
IN_CH = N_PLAYER + 2          # 6
OUT_CH = 16
KW = 3
W_OUT = N_CARD - KW + 1       # 31
CONV_FLAT = OUT_CH * W_OUT    # 496
N_STATE = N_PLAYER + 5        # 9
FLAT_DIM = 512                # FF input dim of the torch module (496 conv + 16 state)
CARD_FLAT = IN_CH * N_CARD    # 198

# banded-conv layout constants
BAND_SPLIT = 128              # lanes per band in the packed input
XIN_DIM = 2 * BAND_SPLIT      # 256-wide packed data row
CONV_HALF = 256               # per-branch width of each band-dot output
BAND0_POS = 18                # band 0 covers card positions x = 0..17  (outputs w = 0..15)
BAND0_K = BAND0_POS * IN_CH   # 108
BAND1_OFF = 16 * IN_CH        # 96   (band 1 covers x = 16..32, outputs w = 16..30)
BAND1_K = 17 * IN_CH          # 102

F32_MIN = float(np.finfo(np.float32).min)

WEIGHT_ORDER = (
    "wb0", "bb0", "wb1", "bb1",
    "w1p", "b1p", "w2p", "b2p",
    "w1v", "b1v", "w2v", "b2v",
    "w3", "b3",
)


def _leaky(x):
    # max(x, 0.01x) == LeakyReLU(0.01): 2 VALU ops instead of cmp+mul+select
    return jnp.maximum(x, 0.01 * x)


def _round_up(x, m):
    return ((x + m - 1) // m) * m


# ------------------- shared forward math -------------------------
def _forward_math(xin, pen, w):
    """Core math shared by the Pallas kernel and the precision-matched reference.

    xin: (B, 256) packed bf16 row  [band0 card | pad | band1 card | x_state | pad]
    pen: (B, 2)   f32 additive mask penalty (0 or -inf)
    w:   dict of prepared weights (bf16 matmul weights, f32 biases)
    """
    dot = functools.partial(jnp.dot, preferred_element_type=jnp.float32)
    bf16 = jnp.bfloat16
    xin = xin.astype(bf16)

    # two position-banded conv dots; band 1 also carries both state paths in its
    # last 16 output lanes per branch.
    b0 = dot(xin[:, :BAND_SPLIT], w["wb0"]) + w["bb0"]        # (B, 512) f32
    b1 = dot(xin[:, BAND_SPLIT:], w["wb1"]) + w["bb1"]        # (B, 512) f32
    b0 = _leaky(b0)
    # value-branch state lanes (cols 496..511 of band 1) have NO LeakyReLU in torch
    lane = jax.lax.broadcasted_iota(jnp.int32, (1, 2 * CONV_HALF), 1)
    b1 = jnp.where(lane >= 2 * CONV_HALF - OUT_CH, b1, _leaky(b1))

    conv_p = jnp.concatenate([b0[:, :CONV_HALF], b1[:, :CONV_HALF]], axis=-1).astype(bf16)
    conv_v = jnp.concatenate([b0[:, CONV_HALF:], b1[:, CONV_HALF:]], axis=-1).astype(bf16)

    # ---------------- policy branch ----------------
    h1p = _leaky(dot(conv_p, w["w1p"]) + w["b1p"])
    h2p = _leaky(dot(h1p.astype(bf16), w["w2p"]) + w["b2p"])

    # ---------------- value branch ------------------
    h1v = _leaky(dot(conv_v, w["w1v"]) + w["b1v"])
    h2v = _leaky(dot(h1v.astype(bf16), w["w2v"]) + w["b2v"])

    # fused block-diagonal tail dot -> [logit0, logit1, value, 0]
    tail_in = jnp.concatenate([h2p, h2v], axis=-1).astype(bf16)   # (B, 256)
    tail = dot(tail_in, w["w3"]) + w["b3"]                        # (B, 4)

    # mask as additive penalty (finite + -inf == torch masked_fill(-inf))
    # NOTE: rows with every action masked produce NaN logp/entropy exactly like
    # PyTorch masked_fill(-inf)+softmax; no guard is added on purpose.
    logit_m = tail[:, 0:2] + pen
    mx = jnp.max(logit_m, axis=-1, keepdims=True)
    lse = jnp.log(jnp.sum(jnp.exp(logit_m - mx), axis=-1, keepdims=True)) + mx
    logp = logit_m - lse
    probs = jnp.exp(logp)
    clamped = jnp.maximum(logp, F32_MIN)                # torch Categorical.entropy clamp
    ent = -jnp.sum(clamped * probs, axis=-1, keepdims=True)

    return logp, ent, tail[:, 2:3]


# ---------------------------- kernel -----------------------------
def ppo_gen5_kernel(xin_ref, pen_ref, *rest):
    out_ref = rest[-1]
    w = {name: r[...] for name, r in zip(WEIGHT_ORDER, rest[:-1])}
    logp, ent, val = _forward_math(xin_ref[...], pen_ref[...], w)
    # single packed, lane-contiguous store: [logp0, logp1, entropy, value]
    out_ref[...] = jnp.concatenate([logp, ent, val], axis=-1)


# ---------------------- weight preparation ------------------------
def prepare_weights(params):
    """One-time preprocessing (run once per parameter update, NOT per forward)."""
    # stacked conv kernels: (2, 6, 3, 16) [branch, c_in, kw, c_out]
    wc_both = jnp.stack([params["wc_p"].reshape(IN_CH, KW, OUT_CH),
                         params["wc_v"].reshape(IN_CH, KW, OUT_CH)], axis=0)
    ws_both = jnp.stack([params["ws_p"], params["ws_v"]], axis=0)              # (2, 9, 16)
    bc_both = jnp.stack([params["bc_p"], params["bc_v"]], axis=0)              # (2, 16)
    bs_both = jnp.stack([params["bs_p"][0], params["bs_v"][0]], axis=0)        # (2, 16)

    j = np.arange(2 * CONV_HALF)            # 512 output lanes of each band dot
    br = j // CONV_HALF                     # 0 = policy, 1 = value
    jj = j % CONV_HALF

    # ---- band 0: input lanes = card positions x = 0..17 (position-major), pad
    #      output col layout per branch: o*16 + w   (w = 0..15)
    r = np.arange(BAND_SPLIT)
    x0 = r // IN_CH
    c0 = r % IN_CH
    o0 = jj // 16
    w0 = jj % 16
    k0 = x0[:, None] - w0[None, :]
    valid0 = (k0 >= 0) & (k0 < KW) & (x0[:, None] < BAND0_POS)
    wb0 = jnp.where(valid0,
                    wc_both[br[None, :], c0[:, None], np.clip(k0, 0, KW - 1), o0[None, :]],
                    0.0)                                                       # (128, 512)
    bb0 = bc_both[br, o0][None, :]                                             # (1, 512)

    # ---- band 1: input lanes = [card x=16..32 (102) | x_state (9) | pad (17)]
    #      output cols per branch: o*15 + wl (w = 16+wl) for cols 0..239,
    #                              state output channel (col-240) for cols 240..255
    is_sc = jj >= 240
    o1 = np.where(is_sc, 0, jj // 15)
    wl = np.where(is_sc, 0, jj % 15)
    so = np.where(is_sc, jj - 240, 0)
    is_card_row = r < BAND1_K
    is_state_row = (r >= BAND1_K) & (r < BAND1_K + N_STATE)
    xr = np.where(is_card_row, r // IN_CH, 0)
    c1 = np.where(is_card_row, r % IN_CH, 0)
    s1 = np.where(is_state_row, r - BAND1_K, 0)
    k1 = xr[:, None] - wl[None, :]
    conv_valid = is_card_row[:, None] & (~is_sc[None, :]) & (k1 >= 0) & (k1 < KW)
    state_valid = is_state_row[:, None] & is_sc[None, :]
    conv_vals = wc_both[br[None, :], c1[:, None], np.clip(k1, 0, KW - 1), o1[None, :]]
    state_vals = ws_both[br[None, :], s1[:, None], so[None, :]]
    wb1 = jnp.where(conv_valid, conv_vals,
                    jnp.where(state_valid, state_vals, 0.0))                   # (128, 512)
    bb1 = jnp.where(is_sc, bs_both[br, so], bc_both[br, o1])[None, :]          # (1, 512)

    # ---- permute w1 rows to match the new conv-output lane order
    perm = np.empty(FLAT_DIM, dtype=np.int32)
    l0 = np.arange(256)
    perm[:256] = (l0 // 16) * W_OUT + (l0 % 16)            # band0 conv lanes
    l1 = np.arange(240)
    perm[256:496] = (l1 // 15) * W_OUT + 16 + (l1 % 15)    # band1 conv lanes
    perm[496:] = np.arange(496, FLAT_DIM)                  # state lanes
    w1p = params["w1_p"][perm]
    w1v = params["w1_v"][perm]

    # ---- fused tail: [h2_p | h2_v] @ blockdiag(w3_p, w3_v) -> [logit0, logit1, value, 0]
    w3 = jnp.zeros((256, 4), jnp.float32)
    w3 = w3.at[:128, 0:2].set(params["w3_p"])
    w3 = w3.at[128:, 2:3].set(params["w3_v"])
    b3 = jnp.zeros((1, 4), jnp.float32)
    b3 = b3.at[:, 0:2].set(params["b3_p"])
    b3 = b3.at[:, 2:3].set(params["b3_v"])

    bf = lambda a: a.astype(jnp.bfloat16)
    f32 = lambda a: a.astype(jnp.float32)
    return dict(
        wb0=bf(wb0), bb0=f32(bb0), wb1=bf(wb1), bb1=f32(bb1),
        w1p=bf(w1p), b1p=f32(params["b1_p"]),
        w2p=bf(params["w2_p"]), b2p=f32(params["b2_p"]),
        w1v=bf(w1v), b1v=f32(params["b1_v"]),
        w2v=bf(params["w2_v"]), b2v=f32(params["b2_v"]),
        w3=bf(w3), b3=f32(b3),
    )


def init_params(key):
    ks = jax.random.split(key, 20)
    s = 0.05
    nrm = lambda k, shp: (s * jax.random.normal(k, shp)).astype(jnp.float32)
    p = {}
    p["wc_p"], p["bc_p"] = nrm(ks[0], (IN_CH * KW, OUT_CH)), nrm(ks[1], (OUT_CH,))
    p["wc_v"], p["bc_v"] = nrm(ks[2], (IN_CH * KW, OUT_CH)), nrm(ks[3], (OUT_CH,))
    p["ws_p"], p["bs_p"] = nrm(ks[4], (N_STATE, OUT_CH)), nrm(ks[5], (1, OUT_CH))
    p["ws_v"], p["bs_v"] = nrm(ks[6], (N_STATE, OUT_CH)), nrm(ks[7], (1, OUT_CH))
    p["w1_p"], p["b1_p"] = nrm(ks[8], (FLAT_DIM, 256)), nrm(ks[9], (1, 256))
    p["w2_p"], p["b2_p"] = nrm(ks[10], (256, 128)), nrm(ks[11], (1, 128))
    p["w3_p"], p["b3_p"] = nrm(ks[12], (128, N_ACTION)), nrm(ks[13], (1, N_ACTION))
    p["w1_v"], p["b1_v"] = nrm(ks[14], (FLAT_DIM, 256)), nrm(ks[15], (1, 256))
    p["w2_v"], p["b2_v"] = nrm(ks[16], (256, 128)), nrm(ks[17], (1, 128))
    p["w3_v"], p["b3_v"] = nrm(ks[18], (128, 1)), nrm(ks[19], (1, 1))
    return p


# ------------------------- input packing --------------------------
def _pack_inputs(x_card, x_state, legal_move_mask):
    """Build the packed (B,256) bf16 data row and (B,2) f32 mask penalty."""
    B = x_card.shape[0]
    # position-major card layout: pm[b, x*6 + c] = x_card[b, c, 0, x]
    pm = jnp.transpose(x_card.reshape(B, IN_CH, N_CARD).astype(jnp.float32),
                       (0, 2, 1)).reshape(B, CARD_FLAT)
    xs = x_state.astype(jnp.float32)
    z0 = jnp.zeros((B, BAND_SPLIT - BAND0_K), jnp.float32)             # 20
    z1 = jnp.zeros((B, BAND_SPLIT - BAND1_K - N_STATE), jnp.float32)   # 17
    xin = jnp.concatenate([pm[:, :BAND0_K], z0, pm[:, BAND1_OFF:], xs, z1],
                          axis=-1).astype(jnp.bfloat16)                # (B, 256)
    pen = jnp.where(legal_move_mask, -jnp.inf, 0.0).astype(jnp.float32)  # (B, 2)
    return xin, pen


# --------------------------- wrapper ------------------------------
def ppo_gen5_pallas(prep, x_card, x_state, legal_move_mask, *, block_b=None):
    """prep: output of prepare_weights()."""
    B = x_card.shape[0]
    xin, pen = _pack_inputs(x_card, x_state, legal_move_mask)

    kind = jax.devices()[0].device_kind.lower()
    is_v7 = "7" in kind            # v7x: 64 MiB VMEM / 2 TCs; v2..v6 kinds contain no '7'
    if block_b is None:
        block_b = 1024 if is_v7 else 2048
    vmem_limit = (40 if is_v7 else 64) * 1024 * 1024

    TB = min(int(block_b), _round_up(B, 16))
    if is_v7 and B >= 32:          # guarantee >= 2 grid steps so both v7x TCs get work
        TB = min(TB, _round_up((B + 1) // 2, 16))
    TB = max(16, _round_up(TB, 16))
    Bp = _round_up(B, TB)
    if Bp != B:
        xin = jnp.pad(xin, ((0, Bp - B), (0, 0)))
        pen = jnp.pad(pen, ((0, Bp - B), (0, 0)))

    weights = tuple(prep[k] for k in WEIGHT_ORDER)

    data_specs = [
        pl.BlockSpec((TB, XIN_DIM), lambda i: (i, 0)),
        pl.BlockSpec((TB, N_ACTION), lambda i: (i, 0)),
    ]
    # weights stay VMEM-resident across all grid steps
    weight_specs = [pl.BlockSpec(w.shape, lambda i: (0, 0)) for w in weights]

    flops = 2 * Bp * (2 * BAND_SPLIT * 2 * CONV_HALF   # two banded conv+state dots
                      + 2 * FLAT_DIM * 256             # h1 (policy + value)
                      + 2 * 256 * 128                  # h2 (policy + value)
                      + 256 * 4)                       # fused tail
    weight_bytes = sum(int(np.prod(w.shape)) * w.dtype.itemsize for w in weights)
    bytes_accessed = (xin.size * xin.dtype.itemsize + pen.size * 4
                      + weight_bytes + Bp * 4 * 4)
    cost = pl.CostEstimate(flops=int(flops), transcendentals=5 * Bp,
                           bytes_accessed=int(bytes_accessed))

    packed = pl.pallas_call(
        ppo_gen5_kernel,
        out_shape=jax.ShapeDtypeStruct((Bp, 4), jnp.float32),
        grid=(Bp // TB,),
        in_specs=data_specs + weight_specs,
        out_specs=pl.BlockSpec((TB, 4), lambda i: (i, 0)),
        compiler_params=pltpu.CompilerParams(
            dimension_semantics=("parallel",),
            vmem_limit_bytes=vmem_limit),
        cost_estimate=cost,
    )(xin, pen, *weights)

    packed = packed[:B]
    logp = packed[:, 0:2]
    entropy = packed[:, 2]
    value = packed[:, 3:4]
    return logp, entropy, value


def ppo_gen5_forward(prep, x_card, x_state, legal_move_mask, sample_key, action=None):
    """Mirrors ppo_gen_5.forward: returns (action, log_prob, entropy, value)."""
    logp, entropy, value = ppo_gen5_pallas(prep, x_card, x_state, legal_move_mask)
    if action is None:
        # TODO(synk): Categorical.sample() is stochastic; done with jax.random outside the kernel.
        action = jax.random.categorical(sample_key, logp, axis=-1)
    log_prob = jnp.take_along_axis(logp, action[:, None], axis=-1)[:, 0]
    return action, log_prob, entropy, value


# --------------------- pure-f32 semantic reference -----------------
def ppo_gen5_reference(params, x_card, x_state, legal_move_mask):
    B = x_card.shape[0]
    x3 = x_card[:, :, 0, :]                                              # (B, 6, 33)
    win = jnp.stack([x3[:, :, w:w + KW] for w in range(W_OUT)], axis=-1)  # (B,6,3,31)

    def branch(wc, bc, ws, bs, leaky_state, w1, b1, w2, b2, w3, b3):
        wc_r = wc.reshape(IN_CH, KW, OUT_CH)
        conv = jnp.einsum("bckw,cko->bow", win, wc_r) + bc[None, :, None]  # (B,16,31)
        conv = jnp.where(conv > 0, conv, 0.01 * conv).reshape(B, CONV_FLAT)
        st = x_state @ ws + bs
        if leaky_state:
            st = jnp.where(st > 0, st, 0.01 * st)
        cat = jnp.concatenate([conv, st], axis=1)
        h = cat @ w1 + b1
        h = jnp.where(h > 0, h, 0.01 * h)
        h = h @ w2 + b2
        h = jnp.where(h > 0, h, 0.01 * h)
        return h @ w3 + b3

    logit = branch(params["wc_p"], params["bc_p"], params["ws_p"], params["bs_p"], True,
                   params["w1_p"], params["b1_p"], params["w2_p"], params["b2_p"],
                   params["w3_p"], params["b3_p"])
    value = branch(params["wc_v"], params["bc_v"], params["ws_v"], params["bs_v"], False,
                   params["w1_v"], params["b1_v"], params["w2_v"], params["b2_v"],
                   params["w3_v"], params["b3_v"])
    logit_m = jnp.where(legal_move_mask, -jnp.inf, logit)
    logp = jax.nn.log_softmax(logit_m, axis=-1)
    probs = jnp.exp(logp)
    entropy = -jnp.sum(jnp.maximum(logp, F32_MIN) * probs, axis=-1)
    return logp, entropy, value


# ----------------------------- main --------------------------------
if __name__ == "__main__":
    B = 8
    key = jax.random.PRNGKey(0)
    k_param, k_card, k_state, k_sample = jax.random.split(key, 4)

    params = init_params(k_param)
    prep = prepare_weights(params)   # hoisted one-time weight preprocessing

    x_card = jax.random.normal(k_card, (B, IN_CH, 1, N_CARD), jnp.float32)   # NCHW
    x_state = jax.random.normal(k_state, (B, N_STATE), jnp.float32)
    legal_move_mask = jnp.array([[False, False],
                                 [True, False],
                                 [False, True],
                                 [False, False]] * 2, dtype=jnp.bool_)

    action, log_prob, entropy, value = ppo_gen5_forward(
        prep, x_card, x_state, legal_move_mask, k_sample)
    jax.block_until_ready((action, log_prob, entropy, value))

    # 1) exactness: kernel vs the same banded bf16/f32 math in plain JAX
    logp_k, ent_k, val_k = ppo_gen5_pallas(prep, x_card, x_state, legal_move_mask)
    xin_t, pen_t = _pack_inputs(x_card, x_state, legal_move_mask)
    logp_m, ent_m, val_m = _forward_math(xin_t, pen_t, prep)
    np.testing.assert_allclose(np.asarray(logp_k), np.asarray(logp_m), rtol=5e-4, atol=5e-4)
    np.testing.assert_allclose(np.asarray(ent_k), np.asarray(ent_m[:, 0]), rtol=5e-4, atol=5e-4)
    np.testing.assert_allclose(np.asarray(val_k), np.asarray(val_m), rtol=5e-4, atol=5e-4)

    # 2) semantics: kernel (banded/permuted bf16 weights) vs full-f32 PyTorch-layout reference
    logp_r, ent_r, val_r = ppo_gen5_reference(params, x_card, x_state, legal_move_mask)
    np.testing.assert_allclose(np.asarray(logp_k), np.asarray(logp_r), rtol=5e-2, atol=1e-2)
    np.testing.assert_allclose(np.asarray(ent_k), np.asarray(ent_r), rtol=5e-2, atol=1e-2)
    np.testing.assert_allclose(np.asarray(val_k), np.asarray(val_r), rtol=5e-2, atol=1e-2)

    print("KERNEL_OK")
</pallas_src>

<mosaic_0001>
module attributes {stable_mosaic.version = 11 : i64} {
  func.func @ppo_gen5_kernel(%arg0: i32, %arg1: memref<16x256xbf16, #tpu.memory_space<vmem>>, %arg2: memref<16x2xf32, #tpu.memory_space<vmem>>, %arg3: memref<128x512xbf16, #tpu.memory_space<vmem>>, %arg4: memref<1x512xf32, #tpu.memory_space<vmem>>, %arg5: memref<128x512xbf16, #tpu.memory_space<vmem>>, %arg6: memref<1x512xf32, #tpu.memory_space<vmem>>, %arg7: memref<512x256xbf16, #tpu.memory_space<vmem>>, %arg8: memref<1x256xf32, #tpu.memory_space<vmem>>, %arg9: memref<256x128xbf16, #tpu.memory_space<vmem>>, %arg10: memref<1x128xf32, #tpu.memory_space<vmem>>, %arg11: memref<512x256xbf16, #tpu.memory_space<vmem>>, %arg12: memref<1x256xf32, #tpu.memory_space<vmem>>, %arg13: memref<256x128xbf16, #tpu.memory_space<vmem>>, %arg14: memref<1x128xf32, #tpu.memory_space<vmem>>, %arg15: memref<256x4xbf16, #tpu.memory_space<vmem>>, %arg16: memref<1x4xf32, #tpu.memory_space<vmem>>, %arg17: memref<16x4xf32, #tpu.memory_space<vmem>>) attributes {dimension_semantics = [#tpu.dimension_semantics<parallel>], iteration_bounds = array<i64: 1>, scalar_prefetch = 0 : i64, scratch_operands = 0 : i64, tpu.core_type = #tpu.core_type<tc>, window_params = [{transform_indices = @transform_0, window_bounds = array<i64: 16, 256>}, {transform_indices = @transform_1, window_bounds = array<i64: 16, 2>}, {pipeline_mode = #tpu.pipeline_mode<synchronous>, transform_indices = @transform_2, window_bounds = array<i64: 128, 512>}, {pipeline_mode = #tpu.pipeline_mode<synchronous>, transform_indices = @transform_3, window_bounds = array<i64: 1, 512>}, {pipeline_mode = #tpu.pipeline_mode<synchronous>, transform_indices = @transform_4, window_bounds = array<i64: 128, 512>}, {pipeline_mode = #tpu.pipeline_mode<synchronous>, transform_indices = @transform_5, window_bounds = array<i64: 1, 512>}, {pipeline_mode = #tpu.pipeline_mode<synchronous>, transform_indices = @transform_6, window_bounds = array<i64: 512, 256>}, {pipeline_mode = #tpu.pipeline_mode<synchronous>, transform_indices = @transform_7, window_bounds = array<i64: 1, 256>}, {pipeline_mode = #tpu.pipeline_mode<synchronous>, transform_indices = @transform_8, window_bounds = array<i64: 256, 128>}, {pipeline_mode = #tpu.pipeline_mode<synchronous>, transform_indices = @transform_9, window_bounds = array<i64: 1, 128>}, {pipeline_mode = #tpu.pipeline_mode<synchronous>, transform_indices = @transform_10, window_bounds = array<i64: 512, 256>}, {pipeline_mode = #tpu.pipeline_mode<synchronous>, transform_indices = @transform_11, window_bounds = array<i64: 1, 256>}, {pipeline_mode = #tpu.pipeline_mode<synchronous>, transform_indices = @transform_12, window_bounds = array<i64: 256, 128>}, {pipeline_mode = #tpu.pipeline_mode<synchronous>, transform_indices = @transform_13, window_bounds = array<i64: 1, 128>}, {pipeline_mode = #tpu.pipeline_mode<synchronous>, transform_indices = @transform_14, window_bounds = array<i64: 256, 4>}, {pipeline_mode = #tpu.pipeline_mode<synchronous>, transform_indices = @transform_15, window_bounds = array<i64: 1, 4>}, {transform_indices = @transform_16, window_bounds = array<i64: 16, 4>}]} {
    %c0 = arith.constant 0 : index
    %c0_0 = arith.constant 0 : index
    %0 = vector.load %arg3[%c0, %c0_0] : memref<128x512xbf16, #tpu.memory_space<vmem>>, vector<128x512xbf16>
    %c0_1 = arith.constant 0 : index
    %c0_2 = arith.constant 0 : index
    %1 = vector.load %arg4[%c0_1, %c0_2] : memref<1x512xf32, #tpu.memory_space<vmem>>, vector<1x512xf32>
    %c0_3 = arith.constant 0 : index
    %c0_4 = arith.constant 0 : index
    %2 = vector.load %arg5[%c0_3, %c0_4] : memref<128x512xbf16, #tpu.memory_space<vmem>>, vector<128x512xbf16>
    %c0_5 = arith.constant 0 : index
    %c0_6 = arith.constant 0 : index
    %3 = vector.load %arg6[%c0_5, %c0_6] : memref<1x512xf32, #tpu.memory_space<vmem>>, vector<1x512xf32>
    %c0_7 = arith.constant 0 : index
    %c0_8 = arith.constant 0 : index
    %4 = vector.load %arg7[%c0_7, %c0_8] : memref<512x256xbf16, #tpu.memory_space<vmem>>, vector<512x256xbf16>
    %c0_9 = arith.constant 0 : index
    %c0_10 = arith.constant 0 : index
    %5 = vector.load %arg8[%c0_9, %c0_10] : memref<1x256xf32, #tpu.memory_space<vmem>>, vector<1x256xf32>
    %c0_11 = arith.constant 0 : index
    %c0_12 = arith.constant 0 : index
    %6 = vector.load %arg9[%c0_11, %c0_12] : memref<256x128xbf16, #tpu.memory_space<vmem>>, vector<256x128xbf16>
    %c0_13 = arith.constant 0 : index
    %c0_14 = arith.constant 0 : index
    %7 = vector.load %arg10[%c0_13, %c0_14] : memref<1x128xf32, #tpu.memory_space<vmem>>, vector<1x128xf32>
    %c0_15 = arith.constant 0 : index
    %c0_16 = arith.constant 0 : index
    %8 = vector.load %arg11[%c0_15, %c0_16] : memref<512x256xbf16, #tpu.memory_space<vmem>>, vector<512x256xbf16>
    %c0_17 = arith.constant 0 : index
    %c0_18 = arith.constant 0 : index
    %9 = vector.load %arg12[%c0_17, %c0_18] : memref<1x256xf32, #tpu.memory_space<vmem>>, vector<1x256xf32>
    %c0_19 = arith.constant 0 : index
    %c0_20 = arith.constant 0 : index
    %10 = vector.load %arg13[%c0_19, %c0_20] : memref<256x128xbf16, #tpu.memory_space<vmem>>, vector<256x128xbf16>
    %c0_21 = arith.constant 0 : index
    %c0_22 = arith.constant 0 : index
    %11 = vector.load %arg14[%c0_21, %c0_22] : memref<1x128xf32, #tpu.memory_space<vmem>>, vector<1x128xf32>
    %c0_23 = arith.constant 0 : index
    %c0_24 = arith.constant 0 : index
    %12 = vector.load %arg15[%c0_23, %c0_24] : memref<256x4xbf16, #tpu.memory_space<vmem>>, vector<256x4xbf16>
    %c0_25 = arith.constant 0 : index
    %c0_26 = arith.constant 0 : index
    %13 = vector.load %arg16[%c0_25, %c0_26] : memref<1x4xf32, #tpu.memory_space<vmem>>, vector<1x4xf32>
    %c0_27 = arith.constant 0 : index
    %c0_28 = arith.constant 0 : index
    %14 = vector.load %arg1[%c0_27, %c0_28] : memref<16x256xbf16, #tpu.memory_space<vmem>>, vector<16x256xbf16>
    %c0_29 = arith.constant 0 : index
    %c0_30 = arith.constant 0 : index
    %15 = vector.load %arg2[%c0_29, %c0_30] : memref<16x2xf32, #tpu.memory_space<vmem>>, vector<16x2xf32>
    %16 = vector.extract_strided_slice %14 {offsets = [0, 0], sizes = [16, 128], strides = [1, 1]} : vector<16x256xbf16> to vector<16x128xbf16>
    %cst = arith.constant dense<0.000000e+00> : vector<16x512xf32>
    %17 = tpu.matmul %16, %0, %cst {dimension_numbers = #tpu.dot_dimension_numbers<[1], [0], [0], [1], [0, 0, 1, 1], [], []>} : vector<16x128xbf16>, vector<128x512xbf16>, vector<16x512xf32> -> vector<16x512xf32>
    %18 = vector.broadcast %1 : vector<1x512xf32> to vector<16x512xf32>
    %19 = arith.addf %17, %18 : vector<16x512xf32>
    %20 = vector.extract_strided_slice %14 {offsets = [0, 128], sizes = [16, 128], strides = [1, 1]} : vector<16x256xbf16> to vector<16x128xbf16>
    %cst_31 = arith.constant dense<0.000000e+00> : vector<16x512xf32>
    %21 = tpu.matmul %20, %2, %cst_31 {dimension_numbers = #tpu.dot_dimension_numbers<[1], [0], [0], [1], [0, 0, 1, 1], [], []>} : vector<16x128xbf16>, vector<128x512xbf16>, vector<16x512xf32> -> vector<16x512xf32>
    %22 = vector.broadcast %3 : vector<1x512xf32> to vector<16x512xf32>
    %23 = arith.addf %21, %22 : vector<16x512xf32>
    %cst_32 = arith.constant 0.00999999977 : f32
    %24 = vector.broadcast %cst_32 : f32 to vector<16x512xf32>
    %25 = arith.mulf %24, %19 : vector<16x512xf32>
    %26 = arith.maximumf %19, %25 : vector<16x512xf32>
    %27 = tpu.iota {dimensions = array<i32: 1>} : vector<1x512xi32>
    %c496_i32 = arith.constant 496 : i32
    %28 = vector.broadcast %c496_i32 : i32 to vector<1x512xi32>
    %29 = arith.cmpi sge, %27, %28 : vector<1x512xi32>
    %cst_33 = arith.constant 0.00999999977 : f32
    %30 = vector.broadcast %cst_33 : f32 to vector<16x512xf32>
    %31 = arith.mulf %30, %23 : vector<16x512xf32>
    %32 = arith.maximumf %23, %31 : vector<16x512xf32>
    %33 = vector.shape_cast %29 : vector<1x512xi1> to vector<1x512xi1>
    %34 = vector.broadcast %33 : vector<1x512xi1> to vector<16x512xi1>
    %35 = arith.select %34, %23, %32 : vector<16x512xi1>, vector<16x512xf32>
    %36 = vector.extract_strided_slice %26 {offsets = [0, 0], sizes = [16, 256], strides = [1, 1]} : vector<16x512xf32> to vector<16x256xf32>
    %37 = vector.extract_strided_slice %35 {offsets = [0, 0], sizes = [16, 256], strides = [1, 1]} : vector<16x512xf32> to vector<16x256xf32>
    %38 = tpu.concatenate %36, %37 in 1 : vector<16x256xf32>, vector<16x256xf32> -> vector<16x512xf32>
    %39 = arith.truncf %38 : vector<16x512xf32> to vector<16x512xbf16>
    %40 = vector.extract_strided_slice %26 {offsets = [0, 256], sizes = [16, 256], strides = [1, 1]} : vector<16x512xf32> to vector<16x256xf32>
    %41 = vector.extract_strided_slice %35 {offsets = [0, 256], sizes = [16, 256], strides = [1, 1]} : vector<16x512xf32> to vector<16x256xf32>
    %42 = tpu.concatenate %40, %41 in 1 : vector<16x256xf32>, vector<16x256xf32> -> vector<16x512xf32>
    %43 = arith.truncf %42 : vector<16x512xf32> to vector<16x512xbf16>
    %cst_34 = arith.constant dense<0.000000e+00> : vector<16x256xf32>
    %44 = tpu.matmul %39, %4, %cst_34 {dimension_numbers = #tpu.dot_dimension_numbers<[1], [0], [0], [1], [0, 0, 1, 1], [], []>} : vector<16x512xbf16>, vector<512x256xbf16>, vector<16x256xf32> -> vector<16x256xf32>
    %45 = vector.broadcast %5 : vector<1x256xf32> to vector<16x256xf32>
    %46 = arith.addf %44, %45 : vector<16x256xf32>
    %cst_35 = arith.constant 0.00999999977 : f32
    %47 = vector.broadcast %cst_35 : f32 to vector<16x256xf32>
    %48 = arith.mulf %47, %46 : vector<16x256xf32>
    %49 = arith.maximumf %46, %48 : vector<16x256xf32>
    %50 = arith.truncf %49 : vector<16x256xf32> to vector<16x256xbf16>
    %cst_36 = arith.constant dense<0.000000e+00> : vector<16x128xf32>
    %51 = tpu.matmul %50, %6, %cst_36 {dimension_numbers = #tpu.dot_dimension_numbers<[1], [0], [0], [1], [0, 0, 1, 1], [], []>} : vector<16x256xbf16>, vector<256x128xbf16>, vector<16x128xf32> -> vector<16x128xf32>
    %52 = vector.broadcast %7 : vector<1x128xf32> to vector<16x128xf32>
    %53 = arith.addf %51, %52 : vector<16x128xf32>
    %cst_37 = arith.constant 0.00999999977 : f32
    %54 = vector.broadcast %cst_37 : f32 to vector<16x128xf32>
    %55 = arith.mulf %54, %53 : vector<16x128xf32>
    %56 = arith.maximumf %53, %55 : vector<16x128xf32>
    %cst_38 = arith.constant dense<0.000000e+00> : vector<16x256xf32>
    %57 = tpu.matmul %43, %8, %cst_38 {dimension_numbers = #tpu.dot_dimension_numbers<[1], [0], [0], [1], [0, 0, 1, 1], [], []>} : vector<16x512xbf16>, vector<512x256xbf16>, vector<16x256xf32> -> vector<16x256xf32>
    %58 = vector.broadcast %9 : vector<1x256xf32> to vector<16x256xf32>
    %59 = arith.addf %57, %58 : vector<16x256xf32>
    %cst_39 = arith.constant 0.00999999977 : f32
    %60 = vector.broadcast %cst_39 : f32 to vector<16x256xf32>
    %61 = arith.mulf %60, %59 : vector<16x256xf32>
    %62 = arith.maximumf %59, %61 : vector<16x256xf32>
    %63 = arith.truncf %62 : vector<16x256xf32> to vector<16x256xbf16>
    %cst_40 = arith.constant dense<0.000000e+00> : vector<16x128xf32>
    %64 = tpu.matmul %63, %10, %cst_40 {dimension_numbers = #tpu.dot_dimension_numbers<[1], [0], [0], [1], [0, 0, 1, 1], [], []>} : vector<16x256xbf16>, vector<256x128xbf16>, vector<16x128xf32> -> vector<16x128xf32>
    %65 = vector.broadcast %11 : vector<1x128xf32> to vector<16x128xf32>
    %66 = arith.addf %64, %65 : vector<16x128xf32>
    %cst_41 = arith.constant 0.00999999977 : f32
    %67 = vector.broadcast %cst_41 : f32 to vector<16x128xf32>
    %68 = arith.mulf %67, %66 : vector<16x128xf32>
    %69 = arith.maximumf %66, %68 : vector<16x128xf32>
    %70 = tpu.concatenate %56, %69 in 1 : vector<16x128xf32>, vector<16x128xf32> -> vector<16x256xf32>
    %71 = arith.truncf %70 : vector<16x256xf32> to vector<16x256xbf16>
    %cst_42 = arith.constant dense<0.000000e+00> : vector<16x4xf32>
    %72 = tpu.matmul %71, %12, %cst_42 {dimension_numbers = #tpu.dot_dimension_numbers<[1], [0], [0], [1], [0, 0, 1, 1], [], []>} : vector<16x256xbf16>, vector<256x4xbf16>, vector<16x4xf32> -> vector<16x4xf32>
    %73 = vector.broadcast %13 : vector<1x4xf32> to vector<16x4xf32>
    %74 = arith.addf %72, %73 : vector<16x4xf32>
    %75 = vector.extract_strided_slice %74 {offsets = [0, 0], sizes = [16, 2], strides = [1, 1]} : vector<16x4xf32> to vector<16x2xf32>
    %76 = arith.addf %75, %15 : vector<16x2xf32>
    %cst_43 = arith.constant dense<0xFF800000> : vector<16xf32>
    %77 = vector.multi_reduction <maximumf>, %76, %cst_43 [1] : vector<16x2xf32> to vector<16xf32>
    %78 = vector.shape_cast %77 : vector<16xf32> to vector<16x1xf32>
    %79 = vector.broadcast %78 : vector<16x1xf32> to vector<16x2xf32>
    %80 = arith.subf %76, %79 : vector<16x2xf32>
    %81 = math.exp %80 : vector<16x2xf32>
    %cst_44 = arith.constant dense<0.000000e+00> : vector<16xf32>
    %82 = vector.multi_reduction <add>, %81, %cst_44 [1] : vector<16x2xf32> to vector<16xf32>
    %83 = vector.shape_cast %82 : vector<16xf32> to vector<16x1xf32>
    %84 = math.log %83 : vector<16x1xf32>
    %85 = arith.addf %84, %78 : vector<16x1xf32>
    %86 = vector.broadcast %85 : vector<16x1xf32> to vector<16x2xf32>
    %87 = arith.subf %76, %86 : vector<16x2xf32>
    %88 = math.exp %87 : vector<16x2xf32>
    %cst_45 = arith.constant -3.40282347E+38 : f32
    %89 = vector.broadcast %cst_45 : f32 to vector<16x2xf32>
    %90 = arith.maximumf %87, %89 : vector<16x2xf32>
    %91 = arith.mulf %90, %88 : vector<16x2xf32>
    %cst_46 = arith.constant dense<0.000000e+00> : vector<16xf32>
    %92 = vector.multi_reduction <add>, %91, %cst_46 [1] : vector<16x2xf32> to vector<16xf32>
    %93 = vector.shape_cast %92 : vector<16xf32> to vector<16x1xf32>
    %cst_47 = arith.constant 0.000000e+00 : f32
    %94 = vector.broadcast %cst_47 : f32 to vector<16x1xf32>
    %95 = arith.subf %94, %93 : vector<16x1xf32>
    %96 = vector.extract_strided_slice %74 {offsets = [0, 2], sizes = [16, 1], strides = [1, 1]} : vector<16x4xf32> to vector<16x1xf32>
    %97 = tpu.concatenate %87, %95, %96 in 1 : vector<16x2xf32>, vector<16x1xf32>, vector<16x1xf32> -> vector<16x4xf32>
    %c0_48 = arith.constant 0 : index
    %c0_49 = arith.constant 0 : index
    %98 = vector.load %arg17[%c0_48, %c0_49] : memref<16x4xf32, #tpu.memory_space<vmem>>, vector<16x4xf32>
    tpu.vector_store %arg17[%c0_48, %c0_49], %97 {strides = array<i32>} : memref<16x4xf32, #tpu.memory_space<vmem>>, vector<16x4xf32>,
    return
  }
  func.func @transform_0(%arg0: i32) -> (i32, i32) {
    %c0_i32 = arith.constant 0 : i32
    %c0_i32_0 = arith.constant 0 : i32
    return %arg0, %c0_i32 : i32, i32
  }
  func.func @transform_1(%arg0: i32) -> (i32, i32) {
    %c0_i32 = arith.constant 0 : i32
    %c0_i32_0 = arith.constant 0 : i32
    return %arg0, %c0_i32 : i32, i32
  }
  func.func @transform_2(%arg0: i32) -> (i32, i32) {
    %c0_i32 = arith.constant 0 : i32
    %c0_i32_0 = arith.constant 0 : i32
    %c0_i32_1 = arith.constant 0 : i32
    return %c0_i32, %c0_i32_0 : i32, i32
  }
  func.func @transform_3(%arg0: i32) -> (i32, i32) {
    %c0_i32 = arith.constant 0 : i32
    %c0_i32_0 = arith.constant 0 : i32
    %c0_i32_1 = arith.constant 0 : i32
    return %c0_i32, %c0_i32_0 : i32, i32
  }
  func.func @transform_4(%arg0: i32) -> (i32, i32) {
    %c0_i32 = arith.constant 0 : i32
    %c0_i32_0 = arith.constant 0 : i32
    %c0_i32_1 = arith.constant 0 : i32
    return %c0_i32, %c0_i32_0 : i32, i32
  }
  func.func @transform_5(%arg0: i32) -> (i32, i32) {
    %c0_i32 = arith.constant 0 : i32
    %c0_i32_0 = arith.constant 0 : i32
    %c0_i32_1 = arith.constant 0 : i32
    return %c0_i32, %c0_i32_0 : i32, i32
  }
  func.func @transform_6(%arg0: i32) -> (i32, i32) {
    %c0_i32 = arith.constant 0 : i32
    %c0_i32_0 = arith.constant 0 : i32
    %c0_i32_1 = arith.constant 0 : i32
    return %c0_i32, %c0_i32_0 : i32, i32
  }
  func.func @transform_7(%arg0: i32) -> (i32, i32) {
    %c0_i32 = arith.constant 0 : i32
    %c0_i32_0 = arith.constant 0 : i32
    %c0_i32_1 = arith.constant 0 : i32
    return %c0_i32, %c0_i32_0 : i32, i32
  }
  func.func @transform_8(%arg0: i32) -> (i32, i32) {
    %c0_i32 = arith.constant 0 : i32
    %c0_i32_0 = arith.constant 0 : i32
    %c0_i32_1 = arith.constant 0 : i32
    return %c0_i32, %c0_i32_0 : i32, i32
  }
  func.func @transform_9(%arg0: i32) -> (i32, i32) {
    %c0_i32 = arith.constant 0 : i32
    %c0_i32_0 = arith.constant 0 : i32
    %c0_i32_1 = arith.constant 0 : i32
    return %c0_i32, %c0_i32_0 : i32, i32
  }
  func.func @transform_10(%arg0: i32) -> (i32, i32) {
    %c0_i32 = arith.constant 0 : i32
    %c0_i32_0 = arith.constant 0 : i32
    %c0_i32_1 = arith.constant 0 : i32
    return %c0_i32, %c0_i32_0 : i32, i32
  }
  func.func @transform_11(%arg0: i32) -> (i32, i32) {
    %c0_i32 = arith.constant 0 : i32
    %c0_i32_0 = arith.constant 0 : i32
    %c0_i32_1 = arith.constant 0 : i32
    return %c0_i32, %c0_i32_0 : i32, i32
  }
  func.func @transform_12(%arg0: i32) -> (i32, i32) {
    %c0_i32 = arith.constant 0 : i32
    %c0_i32_0 = arith.constant 0 : i32
    %c0_i32_1 = arith.constant 0 : i32
    return %c0_i32, %c0_i32_0 : i32, i32
  }
  func.func @transform_13(%arg0: i32) -> (i32, i32) {
    %c0_i32 = arith.constant 0 : i32
    %c0_i32_0 = arith.constant 0 : i32
    %c0_i32_1 = arith.constant 0 : i32
    return %c0_i32, %c0_i32_0 : i32, i32
  }
  func.func @transform_14(%arg0: i32) -> (i32, i32) {
    %c0_i32 = arith.constant 0 : i32
    %c0_i32_0 = arith.constant 0 : i32
    %c0_i32_1 = arith.constant 0 : i32
    return %c0_i32, %c0_i32_0 : i32, i32
  }
  func.func @transform_15(%arg0: i32) -> (i32, i32) {
    %c0_i32 = arith.constant 0 : i32
    %c0_i32_0 = arith.constant 0 : i32
    %c0_i32_1 = arith.constant 0 : i32
    return %c0_i32, %c0_i32_0 : i32, i32
  }
  func.func @transform_16(%arg0: i32) -> (i32, i32) {
    %c0_i32 = arith.constant 0 : i32
    %c0_i32_0 = arith.constant 0 : i32
    return %arg0, %c0_i32 : i32, i32
  }
}

</mosaic_0001>

<llo_original>
// kernel: tpu_custom_call.1
$region0: #{tpu_custom_call.1}
  #allocation0 [shape = 'u32[]', space=smem, size = 0x4, offset = 0x4, fixed_abs, tag = 'smem constant byte address 0x4 - core index']
  #allocation1 [shape = 'u32[72,128]{1,0:T(1,128)}', space=vmem, size = 0x9000, scoped, tag = 'internal scratch']
  %s0 = inlined_call_operand.vmem [shape: bf16[16,256], index: 0, kind: input, shape index: {}]
  %s1 = inlined_call_operand.vmem [shape: f32[16,2], index: 1, kind: input, shape index: {}]
  %s2 = inlined_call_operand.hbm [shape: bf16[128,512], index: 2, kind: input, shape index: {}]
  %s3 = inlined_call_operand.vmem [shape: f32[1,512], index: 3, kind: input, shape index: {}]
  %s4 = inlined_call_operand.hbm [shape: bf16[128,512], index: 4, kind: input, shape index: {}]
  %s5 = inlined_call_operand.vmem [shape: f32[1,512], index: 5, kind: input, shape index: {}]
  %s6 = inlined_call_operand.hbm [shape: bf16[512,256], index: 6, kind: input, shape index: {}]
  %s7 = inlined_call_operand.vmem [shape: f32[1,256], index: 7, kind: input, shape index: {}]
  %s8 = inlined_call_operand.vmem [shape: bf16[256,128], index: 8, kind: input, shape index: {}]
  %s9 = inlined_call_operand.hbm [shape: f32[1,128], index: 9, kind: input, shape index: {}]
  %s10 = inlined_call_operand.hbm [shape: bf16[512,256], index: 10, kind: input, shape index: {}]
  %s11 = inlined_call_operand.hbm [shape: f32[1,256], index: 11, kind: input, shape index: {}]
  %s12 = inlined_call_operand.hbm [shape: bf16[256,128], index: 12, kind: input, shape index: {}]
  %s13 = inlined_call_operand.vmem [shape: f32[1,128], index: 13, kind: input, shape index: {}]
  %s14 = inlined_call_operand.vmem [shape: bf16[256,4], index: 14, kind: input, shape index: {}]
  %s15 = inlined_call_operand.vmem [shape: f32[1,4], index: 15, kind: input, shape index: {}]
  %s16 = inlined_call_operand.vmem [shape: f32[16,4], index: 16, kind: output, shape index: {}]
  %s17 = sld [smem:[#allocation0]]
  $region102: #{tpu_custom_call.1} parent=0
    _
  %s19 = ssub.s32 1, %s17
  %s20 = scalar_select 0, %s19, %s17
  $region1: #{tpu_custom_call.1} parent=0
    #allocation2 [shape = 'u8[131072]{0}', space=vmem, size = 0x20000, scoped, tag = 'input window, operand 2, single buffered']
    #allocation3 [shape = 's32[1]{0}', space=sflag, size = 0x4, scoped, tag = 'scoped memory for tpu_custom_call.1']
    #allocation4 [shape = 'u8[131072]{0}', space=vmem, size = 0x20000, scoped, tag = 'input window, operand 4, single buffered']
    #allocation5 [shape = 's32[1]{0}', space=sflag, size = 0x4, scoped, tag = 'scoped memory for tpu_custom_call.1']
    #allocation6 [shape = 'u8[262144]{0}', space=vmem, size = 0x40000, scoped, tag = 'input window, operand 6, single buffered']
    #allocation7 [shape = 'u8[512]{0}', space=vmem, size = 0x400, scoped, tag = 'input window, operand 9, single buffered']
    #allocation8 [shape = 's32[1]{0}', space=sflag, size = 0x4, scoped, tag = 'scoped memory for tpu_custom_call.1']
    #allocation9 [shape = 'u8[262144]{0}', space=vmem, size = 0x40000, scoped, tag = 'input window, operand 10, single buffered']
    #allocation10 [shape = 'u8[1024]{0}', space=vmem, size = 0x400, scoped, tag = 'input window, operand 11, single buffered']
    #allocation11 [shape = 's32[1]{0}', space=sflag, size = 0x4, scoped, tag = 'scoped memory for tpu_custom_call.1']
    #allocation12 [shape = 'u8[65536]{0}', space=vmem, size = 0x10000, scoped, tag = 'input window, operand 12, single buffered']
    %21 = vsyncpa [#allocation3], 0
    %22 = vsyncpa [#allocation5], 0
    %23 = vsyncpa [#allocation8], 0
    %24 = vsyncpa [#allocation11], 0
    // Predicated region
    $region2: #{tpu_custom_call.1} parent=1 // pred_check
      _
    $region3: #{tpu_custom_call.1} parent=1 // pred_check_branch
      %26 = sbr.rel (0) target = $region5
    $region4: #{tpu_custom_call.1} parent=1 // pred_region
      _
    $region5: #{tpu_custom_call.1} parent=1 // pred_fallthru
      _
    // Predicated region
    $region6: #{tpu_custom_call.1} parent=1 // pred_check
      _
    $region7: #{tpu_custom_call.1} parent=1 // pred_check_branch
      %28 = sbr.rel (0) target = $region9
    $region8: #{tpu_custom_call.1} parent=1 // pred_region
      _
    $region9: #{tpu_custom_call.1} parent=1 // pred_fallthru
      _
    // Predicated region
    $region10: #{tpu_custom_call.1} parent=1 // pred_check
      _
    $region11: #{tpu_custom_call.1} parent=1 // pred_check_branch
      %30 = sbr.rel (0) target = $region13
    $region12: #{tpu_custom_call.1} parent=1 // pred_region
      %32 = vsyncadd [#allocation3], 0
      %s33 = sshll.u32 %s2, 4
      %s34 = int_to_ptr.hbm [resolvable:$true] %s33
      %s35 = sshll.u32 [#allocation2], 4
      %s36 = int_to_ptr.vmem [resolvable:$true] %s35
      %41 = dma.hbm_to_vmem [thread:$0]  %s34, 4096, %s36, [#allocation3], 256, 256, 16
    $region13: #{tpu_custom_call.1} parent=1 // pred_fallthru
      _
    // Predicated region
    $region14: #{tpu_custom_call.1} parent=1 // pred_check
      _
    $region15: #{tpu_custom_call.1} parent=1 // pred_check_branch
      %43 = sbr.rel (0) target = $region17
    $region16: #{tpu_custom_call.1} parent=1 // pred_region
      _
    $region17: #{tpu_custom_call.1} parent=1 // pred_fallthru
      _
    // Predicated region
    $region18: #{tpu_custom_call.1} parent=1 // pred_check
      _
    $region19: #{tpu_custom_call.1} parent=1 // pred_check_branch
      %45 = sbr.rel (0) target = $region21
    $region20: #{tpu_custom_call.1} parent=1 // pred_region
      %47 = vsyncadd [#allocation5], 0
      %s48 = sshll.u32 %s4, 4
      %s49 = int_to_ptr.hbm [resolvable:$true] %s48
      %s50 = sshll.u32 [#allocation4], 4
      %s51 = int_to_ptr.vmem [resolvable:$true] %s50
      %56 = dma.hbm_to_vmem [thread:$0]  %s49, 4096, %s51, [#allocation5], 256, 256, 16
    $region21: #{tpu_custom_call.1} parent=1 // pred_fallthru
      _
    // Predicated region
    $region22: #{tpu_custom_call.1} parent=1 // pred_check
      _
    $region23: #{tpu_custom_call.1} parent=1 // pred_check_branch
      %58 = sbr.rel (0) target = $region25
    $region24: #{tpu_custom_call.1} parent=1 // pred_region
      _
    $region25: #{tpu_custom_call.1} parent=1 // pred_fallthru
      _
    // Predicated region
    $region26: #{tpu_custom_call.1} parent=1 // pred_check
      _
    $region27: #{tpu_custom_call.1} parent=1 // pred_check_branch
      %60 = sbr.rel (0) target = $region29
    $region28: #{tpu_custom_call.1} parent=1 // pred_region
      %62 = vsyncadd [#allocation5], 0
      %s63 = sshll.u32 %s6, 4
      %s64 = int_to_ptr.hbm [resolvable:$true] %s63
      %s65 = sshll.u32 [#allocation6], 4
      %s66 = int_to_ptr.vmem [resolvable:$true] %s65
      %71 = dma.hbm_to_vmem [thread:$0]  %s64, 8192, %s66, [#allocation5], 128, 128, 8
    $region29: #{tpu_custom_call.1} parent=1 // pred_fallthru
      _
    // Predicated region
    $region30: #{tpu_custom_call.1} parent=1 // pred_check
      _
    $region31: #{tpu_custom_call.1} parent=1 // pred_check_branch
      %73 = sbr.rel (0) target = $region33
    $region32: #{tpu_custom_call.1} parent=1 // pred_region
      _
    $region33: #{tpu_custom_call.1} parent=1 // pred_fallthru
      _
    // Predicated region
    $region34: #{tpu_custom_call.1} parent=1 // pred_check
      _
    $region35: #{tpu_custom_call.1} parent=1 // pred_check_branch
      %75 = sbr.rel (0) target = $region37
    $region36: #{tpu_custom_call.1} parent=1 // pred_region
      _
    $region37: #{tpu_custom_call.1} parent=1 // pred_fallthru
      _
    // Predicated region
    $region38: #{tpu_custom_call.1} parent=1 // pred_check
      _
    $region39: #{tpu_custom_call.1} parent=1 // pred_check_branch
      %77 = sbr.rel (0) target = $region41
    $region40: #{tpu_custom_call.1} parent=1 // pred_region
      %79 = vsyncadd [#allocation8], 0
      %s81 = sshll.u32 %s9, 4
      %s82 = int_to_ptr.hbm [resolvable:$true] %s81
      %s83 = sshll.u32 [#allocation7], 4
      %s84 = int_to_ptr.vmem [resolvable:$true] %s83
      %86 = dma.hbm_to_vmem [thread:$0]  %s82, 16, %s84, [#allocation8]
    $region41: #{tpu_custom_call.1} parent=1 // pred_fallthru
      _
    // Predicated region
    $region42: #{tpu_custom_call.1} parent=1 // pred_check
      _
    $region43: #{tpu_custom_call.1} parent=1 // pred_check_branch
      %88 = sbr.rel (0) target = $region45
    $region44: #{tpu_custom_call.1} parent=1 // pred_region
      %90 = vsyncadd [#allocation8], 0
      %s91 = sshll.u32 %s10, 4
      %s92 = int_to_ptr.hbm [resolvable:$true] %s91
      %s93 = sshll.u32 [#allocation9], 4
      %s94 = int_to_ptr.vmem [resolvable:$true] %s93
      %99 = dma.hbm_to_vmem [thread:$0]  %s92, 8192, %s94, [#allocation8], 128, 128, 8
    $region45: #{tpu_custom_call.1} parent=1 // pred_fallthru
      _
    // Predicated region
    $region46: #{tpu_custom_call.1} parent=1 // pred_check
      _
    $region47: #{tpu_custom_call.1} parent=1 // pred_check_branch
      %101 = sbr.rel (0) target = $region49
    $region48: #{tpu_custom_call.1} parent=1 // pred_region
      %103 = vsyncadd [#allocation11], 0
      %s105 = sshll.u32 %s11, 4
      %s106 = int_to_ptr.hbm [resolvable:$true] %s105
      %s107 = sshll.u32 [#allocation10], 4
      %s108 = int_to_ptr.vmem [resolvable:$true] %s107
      %110 = dma.hbm_to_vmem [thread:$0]  %s106, 32, %s108, [#allocation11]
    $region49: #{tpu_custom_call.1} parent=1 // pred_fallthru
      _
    // Predicated region
    $region50: #{tpu_custom_call.1} parent=1 // pred_check
      _
    $region51: #{tpu_custom_call.1} parent=1 // pred_check_branch
      %112 = sbr.rel (0) target = $region53
    $region52: #{tpu_custom_call.1} parent=1 // pred_region
      %114 = vsyncadd [#allocation11], 0
      %s115 = sshll.u32 %s12, 4
      %s116 = int_to_ptr.hbm [resolvable:$true] %s115
      %s117 = sshll.u32 [#allocation12], 4
      %s118 = int_to_ptr.vmem [resolvable:$true] %s117
      %123 = dma.hbm_to_vmem [thread:$0]  %s116, 2048, %s118, [#allocation11], 64, 64, 4
    $region53: #{tpu_custom_call.1} parent=1 // pred_fallthru
      _
    // Predicated region
    $region54: #{tpu_custom_call.1} parent=1 // pred_check
      _
    $region55: #{tpu_custom_call.1} parent=1 // pred_check_branch
      %125 = sbr.rel (0) target = $region57
    $region56: #{tpu_custom_call.1} parent=1 // pred_region
      _
    $region57: #{tpu_custom_call.1} parent=1 // pred_fallthru
      _
    // Predicated region
    $region58: #{tpu_custom_call.1} parent=1 // pred_check
      _
    $region59: #{tpu_custom_call.1} parent=1 // pred_check_branch
      %127 = sbr.rel (0) target = $region61
    $region60: #{tpu_custom_call.1} parent=1 // pred_region
      _
    $region61: #{tpu_custom_call.1} parent=1 // pred_fallthru
      _
    // Predicated region
    $region62: #{tpu_custom_call.1} parent=1 // pred_check
      _
    $region63: #{tpu_custom_call.1} parent=1 // pred_check_branch
      %129 = sbr.rel (0) target = $region65
    $region64: #{tpu_custom_call.1} parent=1 // pred_region
      _
    $region65: #{tpu_custom_call.1} parent=1 // pred_fallthru
      _
    // Predicated region
    $region66: #{tpu_custom_call.1} parent=1 // pred_check
      _
    $region67: #{tpu_custom_call.1} parent=1 // pred_check_branch
      %131 = sbr.rel (0) target = $region69
    $region68: #{tpu_custom_call.1} parent=1 // pred_region
      %133 = dma.done [#allocation3], 4096
    $region69: #{tpu_custom_call.1} parent=1 // pred_fallthru
      _
    // Predicated region
    $region70: #{tpu_custom_call.1} parent=1 // pred_check
      _
    $region71: #{tpu_custom_call.1} parent=1 // pred_check_branch
      %135 = sbr.rel (0) target = $region73
    $region72: #{tpu_custom_call.1} parent=1 // pred_region
      %137 = dma.done [#allocation5], 4096
    $region73: #{tpu_custom_call.1} parent=1 // pred_fallthru
      _
    // Predicated region
    $region74: #{tpu_custom_call.1} parent=1 // pred_check
      _
    $region75: #{tpu_custom_call.1} parent=1 // pred_check_branch
      %139 = sbr.rel (0) target = $region77
    $region76: #{tpu_custom_call.1} parent=1 // pred_region
      %141 = dma.done [#allocation5], 8192
    $region77: #{tpu_custom_call.1} parent=1 // pred_fallthru
      _
    // Predicated region
    $region78: #{tpu_custom_call.1} parent=1 // pred_check
      _
    $region79: #{tpu_custom_call.1} parent=1 // pred_check_branch
      %143 = sbr.rel (0) target = $region81
    $region80: #{tpu_custom_call.1} parent=1 // pred_region
      %145 = dma.done [#allocation8], 16
    $region81: #{tpu_custom_call.1} parent=1 // pred_fallthru
      _
    // Predicated region
    $region82: #{tpu_custom_call.1} parent=1 // pred_check
      _
    $region83: #{tpu_custom_call.1} parent=1 // pred_check_branch
      %147 = sbr.rel (0) target = $region85
    $region84: #{tpu_custom_call.1} parent=1 // pred_region
      %149 = dma.done [#allocation8], 8192
    $region85: #{tpu_custom_call.1} parent=1 // pred_fallthru
      _
    // Predicated region
    $region86: #{tpu_custom_call.1} parent=1 // pred_check
      _
    $region87: #{tpu_custom_call.1} parent=1 // pred_check_branch
      %151 = sbr.rel (0) target = $region89
    $region88: #{tpu_custom_call.1} parent=1 // pred_region
      %153 = dma.done [#allocation11], 32
    $region89: #{tpu_custom_call.1} parent=1 // pred_fallthru
      _
    // Predicated region
    $region90: #{tpu_custom_call.1} parent=1 // pred_check
      _
    $region91: #{tpu_custom_call.1} parent=1 // pred_check_branch
      %155 = sbr.rel (0) target = $region93
    $region92: #{tpu_custom_call.1} parent=1 // pred_region
      %157 = dma.done [#allocation11], 2048
    $region93: #{tpu_custom_call.1} parent=1 // pred_fallthru
      _
    %v158 = vld [vmem:[#allocation2] sm:$0xff]
    %v159 = vld [vmem:[#allocation2 + $0x8] sm:$0xff]
    %v160 = vld [vmem:[#allocation2 + $0x10] sm:$0xff]
    %v161 = vld [vmem:[#allocation2 + $0x18] sm:$0xff]
    %v162 = vld [vmem:[#allocation2 + $0x20] sm:$0xff]
    %v163 = vld [vmem:[#allocation2 + $0x28] sm:$0xff]
    %v164 = vld [vmem:[#allocation2 + $0x30] sm:$0xff]
    %v165 = vld [vmem:[#allocation2 + $0x38] sm:$0xff]
    %v166 = vld [vmem:[#allocation2 + $0x40] sm:$0xff]
    %v167 = vld [vmem:[#allocation2 + $0x48] sm:$0xff]
    %v168 = vld [vmem:[#allocation2 + $0x50] sm:$0xff]
    %v169 = vld [vmem:[#allocation2 + $0x58] sm:$0xff]
    %v170 = vld [vmem:[#allocation2 + $0x60] sm:$0xff]
    %v171 = vld [vmem:[#allocation2 + $0x68] sm:$0xff]
    %v172 = vld [vmem:[#allocation2 + $0x70] sm:$0xff]
    %v173 = vld [vmem:[#allocation2 + $0x78] sm:$0xff]
    %v174 = vld [vmem:[#allocation2 + $0x80] sm:$0xff]
    %v175 = vld [vmem:[#allocation2 + $0x88] sm:$0xff]
    %v176 = vld [vmem:[#allocation2 + $0x90] sm:$0xff]
    %v177 = vld [vmem:[#allocation2 + $0x98] sm:$0xff]
    %v178 = vld [vmem:[#allocation2 + $0xa0] sm:$0xff]
    %v179 = vld [vmem:[#allocation2 + $0xa8] sm:$0xff]
    %v180 = vld [vmem:[#allocation2 + $0xb0] sm:$0xff]
    %v181 = vld [vmem:[#allocation2 + $0xb8] sm:$0xff]
    %v182 = vld [vmem:[#allocation2 + $0xc0] sm:$0xff]
    %v183 = vld [vmem:[#allocation2 + $0xc8] sm:$0xff]
    %v184 = vld [vmem:[#allocation2 + $0xd0] sm:$0xff]
    %v185 = vld [vmem:[#allocation2 + $0xd8] sm:$0xff]
    %v186 = vld [vmem:[#allocation2 + $0xe0] sm:$0xff]
    %v187 = vld [vmem:[#allocation2 + $0xe8] sm:$0xff]
    %v188 = vld [vmem:[#allocation2 + $0xf0] sm:$0xff]
    %v189 = vld [vmem:[#allocation2 + $0xf8] sm:$0xff]
    %v190 = vld [vmem:[%s3] sm:$0xf]
    %v191 = vld [vmem:[#allocation4] sm:$0xff]
    %v192 = vld [vmem:[#allocation4 + $0x8] sm:$0xff]
    %v193 = vld [vmem:[#allocation4 + $0x10] sm:$0xff]
    %v194 = vld [vmem:[#allocation4 + $0x18] sm:$0xff]
    %v195 = vld [vmem:[#allocation4 + $0x20] sm:$0xff]
    %v196 = vld [vmem:[#allocation4 + $0x28] sm:$0xff]
    %v197 = vld [vmem:[#allocation4 + $0x30] sm:$0xff]
    %v198 = vld [vmem:[#allocation4 + $0x38] sm:$0xff]
    %v199 = vld [vmem:[#allocation4 + $0x40] sm:$0xff]
    %v200 = vld [vmem:[#allocation4 + $0x48] sm:$0xff]
    %v201 = vld [vmem:[#allocation4 + $0x50] sm:$0xff]
    %v202 = vld [vmem:[#allocation4 + $0x58] sm:$0xff]
    %v203 = vld [vmem:[#allocation4 + $0x60] sm:$0xff]
    %v204 = vld [vmem:[#allocation4 + $0x68] sm:$0xff]
    %v205 = vld [vmem:[#allocation4 + $0x70] sm:$0xff]
    %v206 = vld [vmem:[#allocation4 + $0x78] sm:$0xff]
    %v207 = vld [vmem:[#allocation4 + $0x80] sm:$0xff]
    %v208 = vld [vmem:[#allocation4 + $0x88] sm:$0xff]
    %v209 = vld [vmem:[#allocation4 + $0x90] sm:$0xff]
    %v210 = vld [vmem:[#allocation4 + $0x98] sm:$0xff]
    %v211 = vld [vmem:[#allocation4 + $0xa0] sm:$0xff]
    %v212 = vld [vmem:[#allocation4 + $0xa8] sm:$0xff]
    %v213 = vld [vmem:[#allocation4 + $0xb0] sm:$0xff]
    %v214 = vld [vmem:[#allocation4 + $0xb8] sm:$0xff]
    %v215 = vld [vmem:[#allocation4 + $0xc0] sm:$0xff]
    %v216 = vld [vmem:[#allocation4 + $0xc8] sm:$0xff]
    %v217 = vld [vmem:[#allocation4 + $0xd0] sm:$0xff]
    %v218 = vld [vmem:[#allocation4 + $0xd8] sm:$0xff]
    %v219 = vld [vmem:[#allocation4 + $0xe0] sm:$0xff]
    %v220 = vld [vmem:[#allocation4 + $0xe8] sm:$0xff]
    %v221 = vld [vmem:[#allocation4 + $0xf0] sm:$0xff]
    %v222 = vld [vmem:[#allocation4 + $0xf8] sm:$0xff]
    %v223 = vld [vmem:[%s5] sm:$0xf]
    %v224 = vld [vmem:[#allocation6] sm:$0xff]
    %v225 = vld [vmem:[#allocation6 + $0x8] sm:$0xff]
    %v226 = vld [vmem:[#allocation6 + $0x10] sm:$0xff]
    %v227 = vld [vmem:[#allocation6 + $0x18] sm:$0xff]
    %v228 = vld [vmem:[#allocation6 + $0x20] sm:$0xff]
    %v229 = vld [vmem:[#allocation6 + $0x28] sm:$0xff]
    %v230 = vld [vmem:[#allocation6 + $0x30] sm:$0xff]
    %v231 = vld [vmem:[#allocation6 + $0x38] sm:$0xff]
    %v232 = vld [vmem:[#allocation6 + $0x40] sm:$0xff]
    %v233 = vld [vmem:[#allocation6 + $0x48] sm:$0xff]
    %v234 = vld [vmem:[#allocation6 + $0x50] sm:$0xff]
    %v235 = vld [vmem:[#allocation6 + $0x58] sm:$0xff]
    %v236 = vld [vmem:[#allocation6 + $0x60] sm:$0xff]
    %v237 = vld [vmem:[#allocation6 + $0x68] sm:$0xff]
    %v238 = vld [vmem:[#allocation6 + $0x70] sm:$0xff]
    %v239 = vld [vmem:[#allocation6 + $0x78] sm:$0xff]
    %v240 = vld [vmem:[#allocation6 + $0x80] sm:$0xff]
    %v241 = vld [vmem:[#allocation6 + $0x88] sm:$0xff]
    %v242 = vld [vmem:[#allocation6 + $0x90] sm:$0xff]
    %v243 = vld [vmem:[#allocation6 + $0x98] sm:$0xff]
    %v244 = vld [vmem:[#allocation6 + $0xa0] sm:$0xff]
    %v245 = vld [vmem:[#allocation6 + $0xa8] sm:$0xff]
    %v246 = vld [vmem:[#allocation6 + $0xb0] sm:$0xff]
    %v247 = vld [vmem:[#allocation6 + $0xb8] sm:$0xff]
    %v248 = vld [vmem:[#allocation6 + $0xc0] sm:$0xff]
    %v249 = vld [vmem:[#allocation6 + $0xc8] sm:$0xff]
    %v250 = vld [vmem:[#allocation6 + $0xd0] sm:$0xff]
    %v251 = vld [vmem:[#allocation6 + $0xd8] sm:$0xff]
    %v252 = vld [vmem:[#allocation6 + $0xe0] sm:$0xff]
    %v253 = vld [vmem:[#allocation6 + $0xe8] sm:$0xff]
    %v254 = vld [vmem:[#allocation6 + $0xf0] sm:$0xff]
    %v255 = vld [vmem:[#allocation6 + $0xf8] sm:$0xff]
    %v256 = vld [vmem:[#allocation6 + $0x100] sm:$0xff]
    %v257 = vld [vmem:[#allocation6 + $0x108] sm:$0xff]
    %v258 = vld [vmem:[#allocation6 + $0x110] sm:$0xff]
    %v259 = vld [vmem:[#allocation6 + $0x118] sm:$0xff]
    %v260 = vld [vmem:[#allocation6 + $0x120] sm:$0xff]
    %v261 = vld [vmem:[#allocation6 + $0x128] sm:$0xff]
    %v262 = vld [vmem:[#allocation6 + $0x130] sm:$0xff]
    %v263 = vld [vmem:[#allocation6 + $0x138] sm:$0xff]
    %v264 = vld [vmem:[#allocation6 + $0x140] sm:$0xff]
    %v265 = vld [vmem:[#allocation6 + $0x148] sm:$0xff]
    %v266 = vld [vmem:[#allocation6 + $0x150] sm:$0xff]
    %v267 = vld [vmem:[#allocation6 + $0x158] sm:$0xff]
    %v268 = vld [vmem:[#allocation6 + $0x160] sm:$0xff]
    %v269 = vld [vmem:[#allocation6 + $0x168] sm:$0xff]
    %v270 = vld [vmem:[#allocation6 + $0x170] sm:$0xff]
    %v271 = vld [vmem:[#allocation6 + $0x178] sm:$0xff]
    %v272 = vld [vmem:[#allocation6 + $0x180] sm:$0xff]
    %v273 = vld [vmem:[#allocation6 + $0x188] sm:$0xff]
    %v274 = vld [vmem:[#allocation6 + $0x190] sm:$0xff]
    %v275 = vld [vmem:[#allocation6 + $0x198] sm:$0xff]
    %v276 = vld [vmem:[#allocation6 + $0x1a0] sm:$0xff]
    %v277 = vld [vmem:[#allocation6 + $0x1a8] sm:$0xff]
    %v278 = vld [vmem:[#allocation6 + $0x1b0] sm:$0xff]
    %v279 = vld [vmem:[#allocation6 + $0x1b8] sm:$0xff]
    %v280 = vld [vmem:[#allocation6 + $0x1c0] sm:$0xff]
    %v281 = vld [vmem:[#allocation6 + $0x1c8] sm:$0xff]
    %v282 = vld [vmem:[#allocation6 + $0x1d0] sm:$0xff]
    %v283 = vld [vmem:[#allocation6 + $0x1d8] sm:$0xff]
    %v284 = vld [vmem:[#allocation6 + $0x1e0] sm:$0xff]
    %v285 = vld [vmem:[#allocation6 + $0x1e8] sm:$0xff]
    %v286 = vld [vmem:[#allocation6 + $0x1f0] sm:$0xff]
    %v287 = vld [vmem:[#allocation6 + $0x1f8] sm:$0xff]
    %v288 = vld [vmem:[%s7] sm:$0x3]
    %v289 = vld [vmem:[%s8] sm:$0xf]
    %v290 = vld [vmem:[%s8 + $0x4] sm:$0xf]
    %v291 = vld [vmem:[%s8 + $0x8] sm:$0xf]
    %v292 = vld [vmem:[%s8 + $0xc] sm:$0xf]
    %v293 = vld [vmem:[%s8 + $0x10] sm:$0xf]
    %v294 = vld [vmem:[%s8 + $0x14] sm:$0xf]
    %v295 = vld [vmem:[%s8 + $0x18] sm:$0xf]
    %v296 = vld [vmem:[%s8 + $0x1c] sm:$0xf]
    %v297 = vld [vmem:[%s8 + $0x20] sm:$0xf]
    %v298 = vld [vmem:[%s8 + $0x24] sm:$0xf]
    %v299 = vld [vmem:[%s8 + $0x28] sm:$0xf]
    %v300 = vld [vmem:[%s8 + $0x2c] sm:$0xf]
    %v301 = vld [vmem:[%s8 + $0x30] sm:$0xf]
    %v302 = vld [vmem:[%s8 + $0x34] sm:$0xf]
    %v303 = vld [vmem:[%s8 + $0x38] sm:$0xf]
    %v304 = vld [vmem:[%s8 + $0x3c] sm:$0xf]
    %v305 = vld [vmem:[%s8 + $0x40] sm:$0xf]
    %v306 = vld [vmem:[%s8 + $0x44] sm:$0xf]
    %v307 = vld [vmem:[%s8 + $0x48] sm:$0xf]
    %v308 = vld [vmem:[%s8 + $0x4c] sm:$0xf]
    %v309 = vld [vmem:[%s8 + $0x50] sm:$0xf]
    %v310 = vld [vmem:[%s8 + $0x54] sm:$0xf]
    %v311 = vld [vmem:[%s8 + $0x58] sm:$0xf]
    %v312 = vld [vmem:[%s8 + $0x5c] sm:$0xf]
    %v313 = vld [vmem:[%s8 + $0x60] sm:$0xf]
    %v314 = vld [vmem:[%s8 + $0x64] sm:$0xf]
    %v315 = vld [vmem:[%s8 + $0x68] sm:$0xf]
    %v316 = vld [vmem:[%s8 + $0x6c] sm:$0xf]
    %v317 = vld [vmem:[%s8 + $0x70] sm:$0xf]
    %v318 = vld [vmem:[%s8 + $0x74] sm:$0xf]
    %v319 = vld [vmem:[%s8 + $0x78] sm:$0xf]
    %v320 = vld [vmem:[%s8 + $0x7c] sm:$0xf]
    %v321 = vld [vmem:[#allocation7] sm:$0x1]
    %v322 = vld [vmem:[#allocation9] sm:$0xff]
    %v323 = vld [vmem:[#allocation9 + $0x8] sm:$0xff]
    %v324 = vld [vmem:[#allocation9 + $0x10] sm:$0xff]
    %v325 = vld [vmem:[#allocation9 + $0x18] sm:$0xff]
    %v326 = vld [vmem:[#allocation9 + $0x20] sm:$0xff]
    %v327 = vld [vmem:[#allocation9 + $0x28] sm:$0xff]
    %v328 = vld [vmem:[#allocation9 + $0x30] sm:$0xff]
    %v329 = vld [vmem:[#allocation9 + $0x38] sm:$0xff]
    %v330 = vld [vmem:[#allocation9 + $0x40] sm:$0xff]
    %v331 = vld [vmem:[#allocation9 + $0x48] sm:$0xff]
    %v332 = vld [vmem:[#allocation9 + $0x50] sm:$0xff]
    %v333 = vld [vmem:[#allocation9 + $0x58] sm:$0xff]
    %v334 = vld [vmem:[#allocation9 + $0x60] sm:$0xff]
    %v335 = vld [vmem:[#allocation9 + $0x68] sm:$0xff]
    %v336 = vld [vmem:[#allocation9 + $0x70] sm:$0xff]
    %v337 = vld [vmem:[#allocation9 + $0x78] sm:$0xff]
    %v338 = vld [vmem:[#allocation9 + $0x80] sm:$0xff]
    %v339 = vld [vmem:[#allocation9 + $0x88] sm:$0xff]
    %v340 = vld [vmem:[#allocation9 + $0x90] sm:$0xff]
    %v341 = vld [vmem:[#allocation9 + $0x98] sm:$0xff]
    %v342 = vld [vmem:[#allocation9 + $0xa0] sm:$0xff]
    %v343 = vld [vmem:[#allocation9 + $0xa8] sm:$0xff]
    %v344 = vld [vmem:[#allocation9 + $0xb0] sm:$0xff]
    %v345 = vld [vmem:[#allocation9 + $0xb8] sm:$0xff]
    %v346 = vld [vmem:[#allocation9 + $0xc0] sm:$0xff]
    %v347 = vld [vmem:[#allocation9 + $0xc8] sm:$0xff]
    %v348 = vld [vmem:[#allocation9 + $0xd0] sm:$0xff]
    %v349 = vld [vmem:[#allocation9 + $0xd8] sm:$0xff]
    %v350 = vld [vmem:[#allocation9 + $0xe0] sm:$0xff]
    %v351 = vld [vmem:[#allocation9 + $0xe8] sm:$0xff]
    %v352 = vld [vmem:[#allocation9 + $0xf0] sm:$0xff]
    %v353 = vld [vmem:[#allocation9 + $0xf8] sm:$0xff]
    %v354 = vld [vmem:[#allocation9 + $0x100] sm:$0xff]
    %v355 = vld [vmem:[#allocation9 + $0x108] sm:$0xff]
    %v356 = vld [vmem:[#allocation9 + $0x110] sm:$0xff]
    %v357 = vld [vmem:[#allocation9 + $0x118] sm:$0xff]
    %v358 = vld [vmem:[#allocation9 + $0x120] sm:$0xff]
    %v359 = vld [vmem:[#allocation9 + $0x128] sm:$0xff]
    %v360 = vld [vmem:[#allocation9 + $0x130] sm:$0xff]
    %v361 = vld [vmem:[#allocation9 + $0x138] sm:$0xff]
    %v362 = vld [vmem:[#allocation9 + $0x140] sm:$0xff]
    %v363 = vld [vmem:[#allocation9 + $0x148] sm:$0xff]
    %v364 = vld [vmem:[#allocation9 + $0x150] sm:$0xff]
    %v365 = vld [vmem:[#allocation9 + $0x158] sm:$0xff]
    %v366 = vld [vmem:[#allocation9 + $0x160] sm:$0xff]
    %v367 = vld [vmem:[#allocation9 + $0x168] sm:$0xff]
    %v368 = vld [vmem:[#allocation9 + $0x170] sm:$0xff]
    %v369 = vld [vmem:[#allocation9 + $0x178] sm:$0xff]
    %v370 = vld [vmem:[#allocation9 + $0x180] sm:$0xff]
    %v371 = vld [vmem:[#allocation9 + $0x188] sm:$0xff]
    %v372 = vld [vmem:[#allocation9 + $0x190] sm:$0xff]
    %v373 = vld [vmem:[#allocation9 + $0x198] sm:$0xff]
    %v374 = vld [vmem:[#allocation9 + $0x1a0] sm:$0xff]
    %v375 = vld [vmem:[#allocation9 + $0x1a8] sm:$0xff]
    %v376 = vld [vmem:[#allocation9 + $0x1b0] sm:$0xff]
    %v377 = vld [vmem:[#allocation9 + $0x1b8] sm:$0xff]
    %v378 = vld [vmem:[#allocation9 + $0x1c0] sm:$0xff]
    %v379 = vld [vmem:[#allocation9 + $0x1c8] sm:$0xff]
    %v380 = vld [vmem:[#allocation9 + $0x1d0] sm:$0xff]
    %v381 = vld [vmem:[#allocation9 + $0x1d8] sm:$0xff]
    %v382 = vld [vmem:[#allocation9 + $0x1e0] sm:$0xff]
    %v383 = vld [vmem:[#allocation9 + $0x1e8] sm:$0xff]
    %v384 = vld [vmem:[#allocation9 + $0x1f0] sm:$0xff]
    %v385 = vld [vmem:[#allocation9 + $0x1f8] sm:$0xff]
    %v386 = vld [vmem:[#allocation10] sm:$0x3]
    %v387 = vld [vmem:[#allocation12] sm:$0xf]
    %v388 = vld [vmem:[#allocation12 + $0x4] sm:$0xf]
    %v389 = vld [vmem:[#allocation12 + $0x8] sm:$0xf]
    %v390 = vld [vmem:[#allocation12 + $0xc] sm:$0xf]
    %v391 = vld [vmem:[#allocation12 + $0x10] sm:$0xf]
    %v392 = vld [vmem:[#allocation12 + $0x14] sm:$0xf]
    %v393 = vld [vmem:[#allocation12 + $0x18] sm:$0xf]
    %v394 = vld [vmem:[#allocation12 + $0x1c] sm:$0xf]
    %v395 = vld [vmem:[#allocation12 + $0x20] sm:$0xf]
    %v396 = vld [vmem:[#allocation12 + $0x24] sm:$0xf]
    %v397 = vld [vmem:[#allocation12 + $0x28] sm:$0xf]
    %v398 = vld [vmem:[#allocation12 + $0x2c] sm:$0xf]
    %v399 = vld [vmem:[#allocation12 + $0x30] sm:$0xf]
    %v400 = vld [vmem:[#allocation12 + $0x34] sm:$0xf]
    %v401 = vld [vmem:[#allocation12 + $0x38] sm:$0xf]
    %v402 = vld [vmem:[#allocation12 + $0x3c] sm:$0xf]
    %v403 = vld [vmem:[#allocation12 + $0x40] sm:$0xf]
    %v404 = vld [vmem:[#allocation12 + $0x44] sm:$0xf]
    %v405 = vld [vmem:[#allocation12 + $0x48] sm:$0xf]
    %v406 = vld [vmem:[#allocation12 + $0x4c] sm:$0xf]
    %v407 = vld [vmem:[#allocation12 + $0x50] sm:$0xf]
    %v408 = vld [vmem:[#allocation12 + $0x54] sm:$0xf]
    %v409 = vld [vmem:[#allocation12 + $0x58] sm:$0xf]
    %v410 = vld [vmem:[#allocation12 + $0x5c] sm:$0xf]
    %v411 = vld [vmem:[#allocation12 + $0x60] sm:$0xf]
    %v412 = vld [vmem:[#allocation12 + $0x64] sm:$0xf]
    %v413 = vld [vmem:[#allocation12 + $0x68] sm:$0xf]
    %v414 = vld [vmem:[#allocation12 + $0x6c] sm:$0xf]
    %v415 = vld [vmem:[#allocation12 + $0x70] sm:$0xf]
    %v416 = vld [vmem:[#allocation12 + $0x74] sm:$0xf]
    %v417 = vld [vmem:[#allocation12 + $0x78] sm:$0xf]
    %v418 = vld [vmem:[#allocation12 + $0x7c] sm:$0xf]
    %v419 = vld [vmem:[%s13] sm:$0x1]
    %v420 = vld [vmem:[%s14] sm:$0xf]
    %v421 = vld [vmem:[%s14 + $0x4] sm:$0xf]
    %v422 = vld [vmem:[%s14 + $0x8] sm:$0xf]
    %v423 = vld [vmem:[%s14 + $0xc] sm:$0xf]
    %v424 = vld [vmem:[%s14 + $0x10] sm:$0xf]
    %v425 = vld [vmem:[%s14 + $0x14] sm:$0xf]
    %v426 = vld [vmem:[%s14 + $0x18] sm:$0xf]
    %v427 = vld [vmem:[%s14 + $0x1c] sm:$0xf]
    %v428 = vld [vmem:[%s14 + $0x20] sm:$0xf]
    %v429 = vld [vmem:[%s14 + $0x24] sm:$0xf]
    %v430 = vld [vmem:[%s14 + $0x28] sm:$0xf]
    %v431 = vld [vmem:[%s14 + $0x2c] sm:$0xf]
    %v432 = vld [vmem:[%s14 + $0x30] sm:$0xf]
    %v433 = vld [vmem:[%s14 + $0x34] sm:$0xf]
    %v434 = vld [vmem:[%s14 + $0x38] sm:$0xf]
    %v435 = vld [vmem:[%s14 + $0x3c] sm:$0xf]
    %v436 = vld [vmem:[%s14 + $0x40] sm:$0xf]
    %v437 = vld [vmem:[%s14 + $0x44] sm:$0xf]
    %v438 = vld [vmem:[%s14 + $0x48] sm:$0xf]
    %v439 = vld [vmem:[%s14 + $0x4c] sm:$0xf]
    %v440 = vld [vmem:[%s14 + $0x50] sm:$0xf]
    %v441 = vld [vmem:[%s14 + $0x54] sm:$0xf]
    %v442 = vld [vmem:[%s14 + $0x58] sm:$0xf]
    %v443 = vld [vmem:[%s14 + $0x5c] sm:$0xf]
    %v444 = vld [vmem:[%s14 + $0x60] sm:$0xf]
    %v445 = vld [vmem:[%s14 + $0x64] sm:$0xf]
    %v446 = vld [vmem:[%s14 + $0x68] sm:$0xf]
    %v447 = vld [vmem:[%s14 + $0x6c] sm:$0xf]
    %v448 = vld [vmem:[%s14 + $0x70] sm:$0xf]
    %v449 = vld [vmem:[%s14 + $0x74] sm:$0xf]
    %v450 = vld [vmem:[%s14 + $0x78] sm:$0xf]
    %v451 = vld [vmem:[%s14 + $0x7c] sm:$0xf]
    %v452 = vld [vmem:[%s15] sm:$0x1]
    %v453 = vld [vmem:[%s0] sm:$0xff]
    %v454 = vld [vmem:[%s0 + $0x8] sm:$0xff]
    %v455 = vld [vmem:[%s1] sm:$0xff]
    %v456 = vld [vmem:[%s1 + $0x8] sm:$0xff]
    %v458 = vperm.slane %v190, 0
    %v459 = vperm.slane %v190, 1
    %v460 = vperm.slane %v190, 2
    %v461 = vperm.slane %v190, 3
    %v468 = vunpack.c.l.b16 %v453
    %v469 = vunpack.c.l.b16 %v454
    %v470 = vpack.c.b16 %v469, %v468
    %v504 = vunpack.c.l.b16 %v158
    %v505 = vunpack.c.h.b16 %v158
    %v506 = vunpack.c.l.b16 %v159
    %v507 = vunpack.c.h.b16 %v159
    %v508 = vunpack.c.l.b16 %v160
    %v509 = vunpack.c.h.b16 %v160
    %v510 = vunpack.c.l.b16 %v161
    %v511 = vunpack.c.h.b16 %v161
    %v512 = vunpack.c.l.b16 %v162
    %v513 = vunpack.c.h.b16 %v162
    %v514 = vunpack.c.l.b16 %v163
    %v515 = vunpack.c.h.b16 %v163
    %v516 = vunpack.c.l.b16 %v164
    %v517 = vunpack.c.h.b16 %v164
    %v518 = vunpack.c.l.b16 %v165
    %v519 = vunpack.c.h.b16 %v165
    %v520 = vunpack.c.l.b16 %v166
    %v521 = vunpack.c.h.b16 %v166
    %v522 = vunpack.c.l.b16 %v167
    %v523 = vunpack.c.h.b16 %v167
    %v524 = vunpack.c.l.b16 %v168
    %v525 = vunpack.c.h.b16 %v168
    %v526 = vunpack.c.l.b16 %v169
    %v527 = vunpack.c.h.b16 %v169
    %v528 = vunpack.c.l.b16 %v170
    %v529 = vunpack.c.h.b16 %v170
    %v530 = vunpack.c.l.b16 %v171
    %v531 = vunpack.c.h.b16 %v171
    %v532 = vunpack.c.l.b16 %v172
    %v533 = vunpack.c.h.b16 %v172
    %v534 = vunpack.c.l.b16 %v173
    %v535 = vunpack.c.h.b16 %v173
    %v536 = vunpack.c.l.b16 %v174
    %v537 = vunpack.c.h.b16 %v174
    %v538 = vunpack.c.l.b16 %v175
    %v539 = vunpack.c.h.b16 %v175
    %v540 = vunpack.c.l.b16 %v176
    %v541 = vunpack.c.h.b16 %v176
    %v542 = vunpack.c.l.b16 %v177
    %v543 = vunpack.c.h.b16 %v177
    %v544 = vunpack.c.l.b16 %v178
    %v545 = vunpack.c.h.b16 %v178
    %v546 = vunpack.c.l.b16 %v179
    %v547 = vunpack.c.h.b16 %v179
    %v548 = vunpack.c.l.b16 %v180
    %v549 = vunpack.c.h.b16 %v180
    %v550 = vunpack.c.l.b16 %v181
    %v551 = vunpack.c.h.b16 %v181
    %v552 = vunpack.c.l.b16 %v182
    %v553 = vunpack.c.h.b16 %v182
    %v554 = vunpack.c.l.b16 %v183
    %v555 = vunpack.c.h.b16 %v183
    %v556 = vunpack.c.l.b16 %v184
    %v557 = vunpack.c.h.b16 %v184
    %v558 = vunpack.c.l.b16 %v185
    %v559 = vunpack.c.h.b16 %v185
    %v560 = vunpack.c.l.b16 %v186
    %v561 = vunpack.c.h.b16 %v186
    %v562 = vunpack.c.l.b16 %v187
    %v563 = vunpack.c.h.b16 %v187
    %v564 = vunpack.c.l.b16 %v188
    %v565 = vunpack.c.h.b16 %v188
    %v566 = vunpack.c.l.b16 %v189
    %v567 = vunpack.c.h.b16 %v189
    %v568 = vpack.c.b16 %v508, %v504
    %v569 = vpack.c.b16 %v509, %v505
    %v570 = vpack.c.b16 %v510, %v506
    %v571 = vpack.c.b16 %v511, %v507
    %v572 = vpack.c.b16 %v516, %v512
    %v573 = vpack.c.b16 %v517, %v513
    %v574 = vpack.c.b16 %v518, %v514
    %v575 = vpack.c.b16 %v519, %v515
    %v576 = vpack.c.b16 %v524, %v520
    %v577 = vpack.c.b16 %v525, %v521
    %v578 = vpack.c.b16 %v526, %v522
    %v579 = vpack.c.b16 %v527, %v523
    %v580 = vpack.c.b16 %v532, %v528
    %v581 = vpack.c.b16 %v533, %v529
    %v582 = vpack.c.b16 %v534, %v530
    %v583 = vpack.c.b16 %v535, %v531
    %v584 = vpack.c.b16 %v540, %v536
    %v585 = vpack.c.b16 %v541, %v537
    %v586 = vpack.c.b16 %v542, %v538
    %v587 = vpack.c.b16 %v543, %v539
    %v588 = vpack.c.b16 %v548, %v544
    %v589 = vpack.c.b16 %v549, %v545
    %v590 = vpack.c.b16 %v550, %v546
    %v591 = vpack.c.b16 %v551, %v547
    %v592 = vpack.c.b16 %v556, %v552
    %v593 = vpack.c.b16 %v557, %v553
    %v594 = vpack.c.b16 %v558, %v554
    %v595 = vpack.c.b16 %v559, %v555
    %v596 = vpack.c.b16 %v564, %v560
    %v597 = vpack.c.b16 %v565, %v561
    %v598 = vpack.c.b16 %v566, %v562
    %v599 = vpack.c.b16 %v567, %v563
    %632 = vmatpush.bf16.msra.mxu0 %v596
    %633 = vmatpush.bf16.msra.mxu0 %v592
    %634 = vmatpush.bf16.msra.mxu0 %v588
    %635 = vmatpush.bf16.msra.mxu0 %v584
    %636 = vmatpush.bf16.msra.mxu0 %v580
    %637 = vmatpush.bf16.msra.mxu0 %v576
    %638 = vmatpush.bf16.msra.mxu0 %v572
    %639 = vmatpush.bf16.msra.mxu0 %v568
    %640 = vmatmul.bf16.gmra.mxu0 %v470
    %v641 = vpop.f32.mrf.mxu0
    %v642 = vadd.f32 %v458, %v641
    %v643 = vpop.f32.mrf.mxu0
    %v644 = vadd.f32 %v458, %v643
    %645 = vdwg.mxu0
    %646 = vmatpush.bf16.msra.mxu0 %v597
    %647 = vmatpush.bf16.msra.mxu0 %v593
    %648 = vmatpush.bf16.msra.mxu0 %v589
    %649 = vmatpush.bf16.msra.mxu0 %v585
    %650 = vmatpush.bf16.msra.mxu0 %v581
    %651 = vmatpush.bf16.msra.mxu0 %v577
    %652 = vmatpush.bf16.msra.mxu0 %v573
    %653 = vmatpush.bf16.msra.mxu0 %v569
    %654 = vmatmul.bf16.gmra.mxu0 %v470
    %v655 = vpop.f32.mrf.mxu0
    %v656 = vadd.f32 %v459, %v655
    %v657 = vpop.f32.mrf.mxu0
    %v658 = vadd.f32 %v459, %v657
    %659 = vdwg.mxu0
    %660 = vmatpush.bf16.msra.mxu0 %v598
    %661 = vmatpush.bf16.msra.mxu0 %v594
    %662 = vmatpush.bf16.msra.mxu0 %v590
    %663 = vmatpush.bf16.msra.mxu0 %v586
    %664 = vmatpush.bf16.msra.mxu0 %v582
    %665 = vmatpush.bf16.msra.mxu0 %v578
    %666 = vmatpush.bf16.msra.mxu0 %v574
    %667 = vmatpush.bf16.msra.mxu0 %v570
    %668 = vmatmul.bf16.gmra.mxu0 %v470
    %v669 = vpop.f32.mrf.mxu0
    %v670 = vadd.f32 %v460, %v669
    %v671 = vpop.f32.mrf.mxu0
    %v672 = vadd.f32 %v460, %v671
    %673 = vdwg.mxu0
    %674 = vmatpush.bf16.msra.mxu0 %v599
    %675 = vmatpush.bf16.msra.mxu0 %v595
    %676 = vmatpush.bf16.msra.mxu0 %v591
    %677 = vmatpush.bf16.msra.mxu0 %v587
    %678 = vmatpush.bf16.msra.mxu0 %v583
    %679 = vmatpush.bf16.msra.mxu0 %v579
    %680 = vmatpush.bf16.msra.mxu0 %v575
    %681 = vmatpush.bf16.msra.mxu0 %v571
    %682 = vmatmul.bf16.gmra.mxu0 %v470
    %v683 = vpop.f32.mrf.mxu0
    %v684 = vadd.f32 %v461, %v683
    %v685 = vpop.f32.mrf.mxu0
    %v686 = vadd.f32 %v461, %v685
    %687 = vdwg.mxu0
    %v689 = vperm.slane %v223, 0
    %v690 = vperm.slane %v223, 1
    %v691 = vperm.slane %v223, 2
    %v692 = vperm.slane %v223, 3
    %v697 = vunpack.c.h.b16 %v453
    %v698 = vunpack.c.h.b16 %v454
    %v699 = vpack.c.b16 %v698, %v697
    %v733 = vunpack.c.l.b16 %v191
    %v734 = vunpack.c.h.b16 %v191
    %v735 = vunpack.c.l.b16 %v192
    %v736 = vunpack.c.h.b16 %v192
    %v737 = vunpack.c.l.b16 %v193
    %v738 = vunpack.c.h.b16 %v193
    %v739 = vunpack.c.l.b16 %v194
    %v740 = vunpack.c.h.b16 %v194
    %v741 = vunpack.c.l.b16 %v195
    %v742 = vunpack.c.h.b16 %v195
    %v743 = vunpack.c.l.b16 %v196
    %v744 = vunpack.c.h.b16 %v196
    %v745 = vunpack.c.l.b16 %v197
    %v746 = vunpack.c.h.b16 %v197
    %v747 = vunpack.c.l.b16 %v198
    %v748 = vunpack.c.h.b16 %v198
    %v749 = vunpack.c.l.b16 %v199
    %v750 = vunpack.c.h.b16 %v199
    %v751 = vunpack.c.l.b16 %v200
    %v752 = vunpack.c.h.b16 %v200
    %v753 = vunpack.c.l.b16 %v201
    %v754 = vunpack.c.h.b16 %v201
    %v755 = vunpack.c.l.b16 %v202
    %v756 = vunpack.c.h.b16 %v202
    %v757 = vunpack.c.l.b16 %v203
    %v758 = vunpack.c.h.b16 %v203
    %v759 = vunpack.c.l.b16 %v204
    %v760 = vunpack.c.h.b16 %v204
    %v761 = vunpack.c.l.b16 %v205
    %v762 = vunpack.c.h.b16 %v205
    %v763 = vunpack.c.l.b16 %v206
    %v764 = vunpack.c.h.b16 %v206
    %v765 = vunpack.c.l.b16 %v207
    %v766 = vunpack.c.h.b16 %v207
    %v767 = vunpack.c.l.b16 %v208
    %v768 = vunpack.c.h.b16 %v208
    %v769 = vunpack.c.l.b16 %v209
    %v770 = vunpack.c.h.b16 %v209
    %v771 = vunpack.c.l.b16 %v210
    %v772 = vunpack.c.h.b16 %v210
    %v773 = vunpack.c.l.b16 %v211
    %v774 = vunpack.c.h.b16 %v211
    %v775 = vunpack.c.l.b16 %v212
    %v776 = vunpack.c.h.b16 %v212
    %v777 = vunpack.c.l.b16 %v213
    %v778 = vunpack.c.h.b16 %v213
    %v779 = vunpack.c.l.b16 %v214
    %v780 = vunpack.c.h.b16 %v214
    %v781 = vunpack.c.l.b16 %v215
    %v782 = vunpack.c.h.b16 %v215
    %v783 = vunpack.c.l.b16 %v216
    %v784 = vunpack.c.h.b16 %v216
    %v785 = vunpack.c.l.b16 %v217
    %v786 = vunpack.c.h.b16 %v217
    %v787 = vunpack.c.l.b16 %v218
    %v788 = vunpack.c.h.b16 %v218
    %v789 = vunpack.c.l.b16 %v219
    %v790 = vunpack.c.h.b16 %v219
    %v791 = vunpack.c.l.b16 %v220
    %v792 = vunpack.c.h.b16 %v220
    %v793 = vunpack.c.l.b16 %v221
    %v794 = vunpack.c.h.b16 %v221
    %v795 = vunpack.c.l.b16 %v222
    %v796 = vunpack.c.h.b16 %v222
    %v797 = vpack.c.b16 %v737, %v733
    %v798 = vpack.c.b16 %v738, %v734
    %v799 = vpack.c.b16 %v739, %v735
    %v800 = vpack.c.b16 %v740, %v736
    %v801 = vpack.c.b16 %v745, %v741
    %v802 = vpack.c.b16 %v746, %v742
    %v803 = vpack.c.b16 %v747, %v743
    %v804 = vpack.c.b16 %v748, %v744
    %v805 = vpack.c.b16 %v753, %v749
    %v806 = vpack.c.b16 %v754, %v750
    %v807 = vpack.c.b16 %v755, %v751
    %v808 = vpack.c.b16 %v756, %v752
    %v809 = vpack.c.b16 %v761, %v757
    %v810 = vpack.c.b16 %v762, %v758
    %v811 = vpack.c.b16 %v763, %v759
    %v812 = vpack.c.b16 %v764, %v760
    %v813 = vpack.c.b16 %v769, %v765
    %v814 = vpack.c.b16 %v770, %v766
    %v815 = vpack.c.b16 %v771, %v767
    %v816 = vpack.c.b16 %v772, %v768
    %v817 = vpack.c.b16 %v777, %v773
    %v818 = vpack.c.b16 %v778, %v774
    %v819 = vpack.c.b16 %v779, %v775
    %v820 = vpack.c.b16 %v780, %v776
    %v821 = vpack.c.b16 %v785, %v781
    %v822 = vpack.c.b16 %v786, %v782
    %v823 = vpack.c.b16 %v787, %v783
    %v824 = vpack.c.b16 %v788, %v784
    %v825 = vpack.c.b16 %v793, %v789
    %v826 = vpack.c.b16 %v794, %v790
    %v827 = vpack.c.b16 %v795, %v791
    %v828 = vpack.c.b16 %v796, %v792
    %861 = vmatpush.bf16.msra.mxu0 %v825
    %862 = vmatpush.bf16.msra.mxu0 %v821
    %863 = vmatpush.bf16.msra.mxu0 %v817
    %864 = vmatpush.bf16.msra.mxu0 %v813
    %865 = vmatpush.bf16.msra.mxu0 %v809
    %866 = vmatpush.bf16.msra.mxu0 %v805
    %867 = vmatpush.bf16.msra.mxu0 %v801
    %868 = vmatpush.bf16.msra.mxu0 %v797
    %869 = vmatmul.bf16.gmra.mxu0 %v699
    %v870 = vpop.f32.mrf.mxu0
    %v871 = vadd.f32 %v689, %v870
    %v872 = vpop.f32.mrf.mxu0
    %v873 = vadd.f32 %v689, %v872
    %874 = vdwg.mxu0
    %875 = vmatpush.bf16.msra.mxu0 %v826
    %876 = vmatpush.bf16.msra.mxu0 %v822
    %877 = vmatpush.bf16.msra.mxu0 %v818
    %878 = vmatpush.bf16.msra.mxu0 %v814
    %879 = vmatpush.bf16.msra.mxu0 %v810
    %880 = vmatpush.bf16.msra.mxu0 %v806
    %881 = vmatpush.bf16.msra.mxu0 %v802
    %882 = vmatpush.bf16.msra.mxu0 %v798
    %883 = vmatmul.bf16.gmra.mxu0 %v699
    %v884 = vpop.f32.mrf.mxu0
    %v885 = vadd.f32 %v690, %v884
    %v886 = vpop.f32.mrf.mxu0
    %v887 = vadd.f32 %v690, %v886
    %888 = vdwg.mxu0
    %889 = vmatpush.bf16.msra.mxu0 %v827
    %890 = vmatpush.bf16.msra.mxu0 %v823
    %891 = vmatpush.bf16.msra.mxu0 %v819
    %892 = vmatpush.bf16.msra.mxu0 %v815
    %893 = vmatpush.bf16.msra.mxu0 %v811
    %894 = vmatpush.bf16.msra.mxu0 %v807
    %895 = vmatpush.bf16.msra.mxu0 %v803
    %896 = vmatpush.bf16.msra.mxu0 %v799
    %897 = vmatmul.bf16.gmra.mxu0 %v699
    %v898 = vpop.f32.mrf.mxu0
    %v899 = vadd.f32 %v691, %v898
    %v900 = vpop.f32.mrf.mxu0
    %v901 = vadd.f32 %v691, %v900
    %902 = vdwg.mxu0
    %903 = vmatpush.bf16.msra.mxu0 %v828
    %904 = vmatpush.bf16.msra.mxu0 %v824
    %905 = vmatpush.bf16.msra.mxu0 %v820
    %906 = vmatpush.bf16.msra.mxu0 %v816
    %907 = vmatpush.bf16.msra.mxu0 %v812
    %908 = vmatpush.bf16.msra.mxu0 %v808
    %909 = vmatpush.bf16.msra.mxu0 %v804
    %910 = vmatpush.bf16.msra.mxu0 %v800
    %911 = vmatmul.bf16.gmra.mxu0 %v699
    %v912 = vpop.f32.mrf.mxu0
    %v913 = vadd.f32 %v692, %v912
    %v914 = vpop.f32.mrf.mxu0
    %v915 = vadd.f32 %v692, %v914
    %916 = vdwg.mxu0
    %v917 = vmul.f32 %v642, 0.01
    %v918 = vmul.f32 %v656, 0.01
    %v919 = vmul.f32 %v670, 0.01
    %v920 = vmul.f32 %v684, 0.01
    %v921 = vmul.f32 %v644, 0.01
    %v922 = vmul.f32 %v658, 0.01
    %v923 = vmul.f32 %v672, 0.01
    %v924 = vmul.f32 %v686, 0.01
    %v925 = vmax.f32 %v642, %v917
    %v926 = vmax.f32 %v656, %v918
    %v927 = vmax.f32 %v670, %v919
    %v928 = vmax.f32 %v684, %v920
    %v929 = vmax.f32 %v644, %v921
    %v930 = vmax.f32 %v658, %v922
    %v931 = vmax.f32 %v672, %v923
    %v932 = vmax.f32 %v686, %v924
    %v933 = vlaneseq
    %v934 = vand.u32 %v933, 127
    %v935 = vadd.s32 %v934, 128
    %v936 = vadd.s32 %v934, 256
    %v937 = vadd.s32 %v934, 384
    %vm938 = vcmp.ge.s32.totalorder %v934, 496
    %vm939 = vcmp.ge.s32.totalorder %v935, 496
    %vm940 = vcmp.ge.s32.totalorder %v936, 496
    %vm941 = vcmp.ge.s32.totalorder %v937, 496
    %v942 = vmul.f32 %v871, 0.01
    %v943 = vmul.f32 %v885, 0.01
    %v944 = vmul.f32 %v899, 0.01
    %v945 = vmul.f32 %v913, 0.01
    %v946 = vmul.f32 %v873, 0.01
    %v947 = vmul.f32 %v887, 0.01
    %v948 = vmul.f32 %v901, 0.01
    %v949 = vmul.f32 %v915, 0.01
    %v950 = vmax.f32 %v871, %v942
    %v951 = vmax.f32 %v885, %v943
    %v952 = vmax.f32 %v899, %v944
    %v953 = vmax.f32 %v913, %v945
    %v954 = vmax.f32 %v873, %v946
    %v955 = vmax.f32 %v887, %v947
    %v956 = vmax.f32 %v901, %v948
    %v957 = vmax.f32 %v915, %v949
    %v958 = vsel %vm938, 1, 0
    %v959 = vsel %vm939, 1, 0
    %v960 = vsel %vm940, 1, 0
    %v961 = vsel %vm941, 1, 0
    %vm962 = vcmp.eq.s32.totalorder %v958, 1
    %vm963 = vcmp.eq.s32.totalorder %v959, 1
    %vm964 = vcmp.eq.s32.totalorder %v960, 1
    %vm965 = vcmp.eq.s32.totalorder %v961, 1
    %v966 = vsel %vm962, %v871, %v950
    %v967 = vsel %vm963, %v885, %v951
    %v968 = vsel %vm964, %v899, %v952
    %v969 = vsel %vm965, %v913, %v953
    %v970 = vsel %vm962, %v873, %v954
    %v971 = vsel %vm963, %v887, %v955
    %v972 = vsel %vm964, %v901, %v956
    %v973 = vsel %vm965, %v915, %v957
    %v974 = vpack.c.bf16 %v929, %v925
    %v975 = vpack.c.bf16 %v930, %v926
    %v976 = vpack.c.bf16 %v970, %v966
    %v977 = vpack.c.bf16 %v971, %v967
    %v978 = vpack.c.bf16 %v931, %v927
    %v979 = vpack.c.bf16 %v932, %v928
    %v980 = vpack.c.bf16 %v972, %v968
    %v981 = vpack.c.bf16 %v973, %v969
    %v983 = vperm.slane %v288, 0
    %v984 = vperm.slane %v288, 1
    %v1051 = vunpack.c.l.b16 %v224
    %v1052 = vunpack.c.h.b16 %v224
    %v1053 = vunpack.c.l.b16 %v225
    %v1054 = vunpack.c.h.b16 %v225
    %v1055 = vunpack.c.l.b16 %v226
    %v1056 = vunpack.c.h.b16 %v226
    %v1057 = vunpack.c.l.b16 %v227
    %v1058 = vunpack.c.h.b16 %v227
    %v1059 = vunpack.c.l.b16 %v228
    %v1060 = vunpack.c.h.b16 %v228
    %v1061 = vunpack.c.l.b16 %v229
    %v1062 = vunpack.c.h.b16 %v229
    %v1063 = vunpack.c.l.b16 %v230
    %v1064 = vunpack.c.h.b16 %v230
    %v1065 = vunpack.c.l.b16 %v231
    %v1066 = vunpack.c.h.b16 %v231
    %v1067 = vunpack.c.l.b16 %v232
    %v1068 = vunpack.c.h.b16 %v232
    %v1069 = vunpack.c.l.b16 %v233
    %v1070 = vunpack.c.h.b16 %v233
    %v1071 = vunpack.c.l.b16 %v234
    %v1072 = vunpack.c.h.b16 %v234
    %v1073 = vunpack.c.l.b16 %v235
    %v1074 = vunpack.c.h.b16 %v235
    %v1075 = vunpack.c.l.b16 %v236
    %v1076 = vunpack.c.h.b16 %v236
    %v1077 = vunpack.c.l.b16 %v237
    %v1078 = vunpack.c.h.b16 %v237
    %v1079 = vunpack.c.l.b16 %v238
    %v1080 = vunpack.c.h.b16 %v238
    %v1081 = vunpack.c.l.b16 %v239
    %v1082 = vunpack.c.h.b16 %v239
    %v1083 = vunpack.c.l.b16 %v240
    %v1084 = vunpack.c.h.b16 %v240
    %v1085 = vunpack.c.l.b16 %v241
    %v1086 = vunpack.c.h.b16 %v241
    %v1087 = vunpack.c.l.b16 %v242
    %v1088 = vunpack.c.h.b16 %v242
    %v1089 = vunpack.c.l.b16 %v243
    %v1090 = vunpack.c.h.b16 %v243
    %v1091 = vunpack.c.l.b16 %v244
    %v1092 = vunpack.c.h.b16 %v244
    %v1093 = vunpack.c.l.b16 %v245
    %v1094 = vunpack.c.h.b16 %v245
    %v1095 = vunpack.c.l.b16 %v246
    %v1096 = vunpack.c.h.b16 %v246
    %v1097 = vunpack.c.l.b16 %v247
    %v1098 = vunpack.c.h.b16 %v247
    %v1099 = vunpack.c.l.b16 %v248
    %v1100 = vunpack.c.h.b16 %v248
    %v1101 = vunpack.c.l.b16 %v249
    %v1102 = vunpack.c.h.b16 %v249
    %v1103 = vunpack.c.l.b16 %v250
    %v1104 = vunpack.c.h.b16 %v250
    %v1105 = vunpack.c.l.b16 %v251
    %v1106 = vunpack.c.h.b16 %v251
    %v1107 = vunpack.c.l.b16 %v252
    %v1108 = vunpack.c.h.b16 %v252
    %v1109 = vunpack.c.l.b16 %v253
    %v1110 = vunpack.c.h.b16 %v253
    %v1111 = vunpack.c.l.b16 %v254
    %v1112 = vunpack.c.h.b16 %v254
    %v1113 = vunpack.c.l.b16 %v255
    %v1114 = vunpack.c.h.b16 %v255
    %v1115 = vunpack.c.l.b16 %v256
    %v1116 = vunpack.c.h.b16 %v256
    %v1117 = vunpack.c.l.b16 %v257
    %v1118 = vunpack.c.h.b16 %v257
    %v1119 = vunpack.c.l.b16 %v258
    %v1120 = vunpack.c.h.b16 %v258
    %v1121 = vunpack.c.l.b16 %v259
    %v1122 = vunpack.c.h.b16 %v259
    %v1123 = vunpack.c.l.b16 %v260
    %v1124 = vunpack.c.h.b16 %v260
    %v1125 = vunpack.c.l.b16 %v261
    %v1126 = vunpack.c.h.b16 %v261
    %v1127 = vunpack.c.l.b16 %v262
    %v1128 = vunpack.c.h.b16 %v262
    %v1129 = vunpack.c.l.b16 %v263
    %v1130 = vunpack.c.h.b16 %v263
    %v1131 = vunpack.c.l.b16 %v264
    %v1132 = vunpack.c.h.b16 %v264
    %v1133 = vunpack.c.l.b16 %v265
    %v1134 = vunpack.c.h.b16 %v265
    %v1135 = vunpack.c.l.b16 %v266
    %v1136 = vunpack.c.h.b16 %v266
    %v1137 = vunpack.c.l.b16 %v267
    %v1138 = vunpack.c.h.b16 %v267
    %v1139 = vunpack.c.l.b16 %v268
    %v1140 = vunpack.c.h.b16 %v268
    %v1141 = vunpack.c.l.b16 %v269
    %v1142 = vunpack.c.h.b16 %v269
    %v1143 = vunpack.c.l.b16 %v270
    %v1144 = vunpack.c.h.b16 %v270
    %v1145 = vunpack.c.l.b16 %v271
    %v1146 = vunpack.c.h.b16 %v271
    %v1147 = vunpack.c.l.b16 %v272
    %v1148 = vunpack.c.h.b16 %v272
    %v1149 = vunpack.c.l.b16 %v273
    %v1150 = vunpack.c.h.b16 %v273
    %v1151 = vunpack.c.l.b16 %v274
    %v1152 = vunpack.c.h.b16 %v274
    %v1153 = vunpack.c.l.b16 %v275
    %v1154 = vunpack.c.h.b16 %v275
    %v1155 = vunpack.c.l.b16 %v276
    %v1156 = vunpack.c.h.b16 %v276
    %v1157 = vunpack.c.l.b16 %v277
    %v1158 = vunpack.c.h.b16 %v277
    %v1159 = vunpack.c.l.b16 %v278
    %v1160 = vunpack.c.h.b16 %v278
    %v1161 = vunpack.c.l.b16 %v279
    %v1162 = vunpack.c.h.b16 %v279
    %v1163 = vunpack.c.l.b16 %v280
    %v1164 = vunpack.c.h.b16 %v280
    %v1165 = vunpack.c.l.b16 %v281
    %v1166 = vunpack.c.h.b16 %v281
    %v1167 = vunpack.c.l.b16 %v282
    %v1168 = vunpack.c.h.b16 %v282
    %v1169 = vunpack.c.l.b16 %v283
    %v1170 = vunpack.c.h.b16 %v283
    %v1171 = vunpack.c.l.b16 %v284
    %v1172 = vunpack.c.h.b16 %v284
    %v1173 = vunpack.c.l.b16 %v285
    %v1174 = vunpack.c.h.b16 %v285
    %v1175 = vunpack.c.l.b16 %v286
    %v1176 = vunpack.c.h.b16 %v286
    %v1177 = vunpack.c.l.b16 %v287
    %v1178 = vunpack.c.h.b16 %v287
    %v1179 = vpack.c.b16 %v1053, %v1051
    %v1180 = vpack.c.b16 %v1054, %v1052
    %v1181 = vpack.c.b16 %v1057, %v1055
    %v1182 = vpack.c.b16 %v1058, %v1056
    %v1183 = vpack.c.b16 %v1061, %v1059
    %v1184 = vpack.c.b16 %v1062, %v1060
    %v1185 = vpack.c.b16 %v1065, %v1063
    %v1186 = vpack.c.b16 %v1066, %v1064
    %v1187 = vpack.c.b16 %v1069, %v1067
    %v1188 = vpack.c.b16 %v1070, %v1068
    %v1189 = vpack.c.b16 %v1073, %v1071
    %v1190 = vpack.c.b16 %v1074, %v1072
    %v1191 = vpack.c.b16 %v1077, %v1075
    %v1192 = vpack.c.b16 %v1078, %v1076
    %v1193 = vpack.c.b16 %v1081, %v1079
    %v1194 = vpack.c.b16 %v1082, %v1080
    %v1195 = vpack.c.b16 %v1085, %v1083
    %v1196 = vpack.c.b16 %v1086, %v1084
    %v1197 = vpack.c.b16 %v1089, %v1087
    %v1198 = vpack.c.b16 %v1090, %v1088
    %v1199 = vpack.c.b16 %v1093, %v1091
    %v1200 = vpack.c.b16 %v1094, %v1092
    %v1201 = vpack.c.b16 %v1097, %v1095
    %v1202 = vpack.c.b16 %v1098, %v1096
    %v1203 = vpack.c.b16 %v1101, %v1099
    %v1204 = vpack.c.b16 %v1102, %v1100
    %v1205 = vpack.c.b16 %v1105, %v1103
    %v1206 = vpack.c.b16 %v1106, %v1104
    %v1207 = vpack.c.b16 %v1109, %v1107
    %v1208 = vpack.c.b16 %v1110, %v1108
    %v1209 = vpack.c.b16 %v1113, %v1111
    %v1210 = vpack.c.b16 %v1114, %v1112
    %v1211 = vpack.c.b16 %v1117, %v1115
    %v1212 = vpack.c.b16 %v1118, %v1116
    %v1213 = vpack.c.b16 %v1121, %v1119
    %v1214 = vpack.c.b16 %v1122, %v1120
    %v1215 = vpack.c.b16 %v1125, %v1123
    %v1216 = vpack.c.b16 %v1126, %v1124
    %v1217 = vpack.c.b16 %v1129, %v1127
    %v1218 = vpack.c.b16 %v1130, %v1128
    %v1219 = vpack.c.b16 %v1133, %v1131
    %v1220 = vpack.c.b16 %v1134, %v1132
    %v1221 = vpack.c.b16 %v1137, %v1135
    %v1222 = vpack.c.b16 %v1138, %v1136
    %v1223 = vpack.c.b16 %v1141, %v1139
    %v1224 = vpack.c.b16 %v1142, %v1140
    %v1225 = vpack.c.b16 %v1145, %v1143
    %v1226 = vpack.c.b16 %v1146, %v1144
    %v1227 = vpack.c.b16 %v1149, %v1147
    %v1228 = vpack.c.b16 %v1150, %v1148
    %v1229 = vpack.c.b16 %v1153, %v1151
    %v1230 = vpack.c.b16 %v1154, %v1152
    %v1231 = vpack.c.b16 %v1157, %v1155
    %v1232 = vpack.c.b16 %v1158, %v1156
    %v1233 = vpack.c.b16 %v1161, %v1159
    %v1234 = vpack.c.b16 %v1162, %v1160
    %v1235 = vpack.c.b16 %v1165, %v1163
    %v1236 = vpack.c.b16 %v1166, %v1164
    %v1237 = vpack.c.b16 %v1169, %v1167
    %v1238 = vpack.c.b16 %v1170, %v1168
    %v1239 = vpack.c.b16 %v1173, %v1171
    %v1240 = vpack.c.b16 %v1174, %v1172
    %v1241 = vpack.c.b16 %v1177, %v1175
    %v1242 = vpack.c.b16 %v1178, %v1176
    %1307 = vmatpush.bf16.msra.mxu0 %v1193
    %1308 = vmatpush.bf16.msra.mxu0 %v1191
    %1309 = vmatpush.bf16.msra.mxu0 %v1189
    %1310 = vmatpush.bf16.msra.mxu0 %v1187
    %1311 = vmatpush.bf16.msra.mxu0 %v1185
    %1312 = vmatpush.bf16.msra.mxu0 %v1183
    %1313 = vmatpush.bf16.msra.mxu0 %v1181
    %1314 = vmatpush.bf16.msra.mxu0 %v1179
    %1315 = vmatmul.bf16.gmra.mxu0 %v974
    %v1316 = vpop.f32.mrf.mxu0
    %v1317 = vadd.f32 %v983, %v1316
    %v1318 = vpop.f32.mrf.mxu0
    %v1319 = vadd.f32 %v983, %v1318
    %1320 = vdwg.mxu0
    %1321 = vmatpush.bf16.msra.mxu0 %v1209
    %1322 = vmatpush.bf16.msra.mxu0 %v1207
    %1323 = vmatpush.bf16.msra.mxu0 %v1205
    %1324 = vmatpush.bf16.msra.mxu0 %v1203
    %1325 = vmatpush.bf16.msra.mxu0 %v1201
    %1326 = vmatpush.bf16.msra.mxu0 %v1199
    %1327 = vmatpush.bf16.msra.mxu0 %v1197
    %1328 = vmatpush.bf16.msra.mxu0 %v1195
    %1329 = vmatmul.bf16.gmra.mxu0 %v975
    %v1330 = vpop.f32.mrf.mxu0
    %v1331 = vadd.f32 %v1317, %v1330
    %v1332 = vpop.f32.mrf.mxu0
    %v1333 = vadd.f32 %v1319, %v1332
    %1334 = vdwg.mxu0
    %1335 = vmatpush.bf16.msra.mxu0 %v1225
    %1336 = vmatpush.bf16.msra.mxu0 %v1223
    %1337 = vmatpush.bf16.msra.mxu0 %v1221
    %1338 = vmatpush.bf16.msra.mxu0 %v1219
    %1339 = vmatpush.bf16.msra.mxu0 %v1217
    %1340 = vmatpush.bf16.msra.mxu0 %v1215
    %1341 = vmatpush.bf16.msra.mxu0 %v1213
    %1342 = vmatpush.bf16.msra.mxu0 %v1211
    %1343 = vmatmul.bf16.gmra.mxu0 %v976
    %v1344 = vpop.f32.mrf.mxu0
    %v1345 = vadd.f32 %v1331, %v1344
    %v1346 = vpop.f32.mrf.mxu0
    %v1347 = vadd.f32 %v1333, %v1346
    %1348 = vdwg.mxu0
    %1349 = vmatpush.bf16.msra.mxu0 %v1241
    %1350 = vmatpush.bf16.msra.mxu0 %v1239
    %1351 = vmatpush.bf16.msra.mxu0 %v1237
    %1352 = vmatpush.bf16.msra.mxu0 %v1235
    %1353 = vmatpush.bf16.msra.mxu0 %v1233
    %1354 = vmatpush.bf16.msra.mxu0 %v1231
    %1355 = vmatpush.bf16.msra.mxu0 %v1229
    %1356 = vmatpush.bf16.msra.mxu0 %v1227
    %1357 = vmatmul.bf16.gmra.mxu0 %v977
    %v1358 = vpop.f32.mrf.mxu0
    %v1359 = vadd.f32 %v1345, %v1358
    %v1360 = vpop.f32.mrf.mxu0
    %v1361 = vadd.f32 %v1347, %v1360
    %1362 = vdwg.mxu0
    %1363 = vmatpush.bf16.msra.mxu0 %v1194
    %1364 = vmatpush.bf16.msra.mxu0 %v1192
    %1365 = vmatpush.bf16.msra.mxu0 %v1190
    %1366 = vmatpush.bf16.msra.mxu0 %v1188
    %1367 = vmatpush.bf16.msra.mxu0 %v1186
    %1368 = vmatpush.bf16.msra.mxu0 %v1184
    %1369 = vmatpush.bf16.msra.mxu0 %v1182
    %1370 = vmatpush.bf16.msra.mxu0 %v1180
    %1371 = vmatmul.bf16.gmra.mxu0 %v974
    %v1372 = vpop.f32.mrf.mxu0
    %v1373 = vadd.f32 %v984, %v1372
    %v1374 = vpop.f32.mrf.mxu0
    %v1375 = vadd.f32 %v984, %v1374
    %1376 = vdwg.mxu0
    %1377 = vmatpush.bf16.msra.mxu0 %v1210
    %1378 = vmatpush.bf16.msra.mxu0 %v1208
    %1379 = vmatpush.bf16.msra.mxu0 %v1206
    %1380 = vmatpush.bf16.msra.mxu0 %v1204
    %1381 = vmatpush.bf16.msra.mxu0 %v1202
    %1382 = vmatpush.bf16.msra.mxu0 %v1200
    %1383 = vmatpush.bf16.msra.mxu0 %v1198
    %1384 = vmatpush.bf16.msra.mxu0 %v1196
    %1385 = vmatmul.bf16.gmra.mxu0 %v975
    %v1386 = vpop.f32.mrf.mxu0
    %v1387 = vadd.f32 %v1373, %v1386
    %v1388 = vpop.f32.mrf.mxu0
    %v1389 = vadd.f32 %v1375, %v1388
    %1390 = vdwg.mxu0
    %1391 = vmatpush.bf16.msra.mxu0 %v1226
    %1392 = vmatpush.bf16.msra.mxu0 %v1224
    %1393 = vmatpush.bf16.msra.mxu0 %v1222
    %1394 = vmatpush.bf16.msra.mxu0 %v1220
    %1395 = vmatpush.bf16.msra.mxu0 %v1218
    %1396 = vmatpush.bf16.msra.mxu0 %v1216
    %1397 = vmatpush.bf16.msra.mxu0 %v1214
    %1398 = vmatpush.bf16.msra.mxu0 %v1212
    %1399 = vmatmul.bf16.gmra.mxu0 %v976
    %v1400 = vpop.f32.mrf.mxu0
    %v1401 = vadd.f32 %v1387, %v1400
    %v1402 = vpop.f32.mrf.mxu0
    %v1403 = vadd.f32 %v1389, %v1402
    %1404 = vdwg.mxu0
    %1405 = vmatpush.bf16.msra.mxu0 %v1242
    %1406 = vmatpush.bf16.msra.mxu0 %v1240
    %1407 = vmatpush.bf16.msra.mxu0 %v1238
    %1408 = vmatpush.bf16.msra.mxu0 %v1236
    %1409 = vmatpush.bf16.msra.mxu0 %v1234
    %1410 = vmatpush.bf16.msra.mxu0 %v1232
    %1411 = vmatpush.bf16.msra.mxu0 %v1230
    %1412 = vmatpush.bf16.msra.mxu0 %v1228
    %1413 = vmatmul.bf16.gmra.mxu0 %v977
    %v1414 = vpop.f32.mrf.mxu0
    %v1415 = vadd.f32 %v1401, %v1414
    %v1416 = vpop.f32.mrf.mxu0
    %v1417 = vadd.f32 %v1403, %v1416
    %1418 = vdwg.mxu0
    %v1419 = vmul.f32 %v1359, 0.01
    %v1420 = vmul.f32 %v1415, 0.01
    %v1421 = vmul.f32 %v1361, 0.01
    %v1422 = vmul.f32 %v1417, 0.01
    %v1423 = vmax.f32 %v1359, %v1419
    %v1424 = vmax.f32 %v1415, %v1420
    %v1425 = vmax.f32 %v1361, %v1421
    %v1426 = vmax.f32 %v1417, %v1422
    %v1427 = vpack.c.bf16 %v1425, %v1423
    %v1428 = vpack.c.bf16 %v1426, %v1424
    %v1430 = vperm.slane %v321, 0
    %v1464 = vunpack.c.l.b16 %v289
    %v1465 = vunpack.c.l.b16 %v290
    %v1466 = vunpack.c.l.b16 %v291
    %v1467 = vunpack.c.l.b16 %v292
    %v1468 = vunpack.c.l.b16 %v293
    %v1469 = vunpack.c.l.b16 %v294
    %v1470 = vunpack.c.l.b16 %v295
    %v1471 = vunpack.c.l.b16 %v296
    %v1472 = vunpack.c.l.b16 %v297
    %v1473 = vunpack.c.l.b16 %v298
    %v1474 = vunpack.c.l.b16 %v299
    %v1475 = vunpack.c.l.b16 %v300
    %v1476 = vunpack.c.l.b16 %v301
    %v1477 = vunpack.c.l.b16 %v302
    %v1478 = vunpack.c.l.b16 %v303
    %v1479 = vunpack.c.l.b16 %v304
    %v1480 = vunpack.c.l.b16 %v305
    %v1481 = vunpack.c.l.b16 %v306
    %v1482 = vunpack.c.l.b16 %v307
    %v1483 = vunpack.c.l.b16 %v308
    %v1484 = vunpack.c.l.b16 %v309
    %v1485 = vunpack.c.l.b16 %v310
    %v1486 = vunpack.c.l.b16 %v311
    %v1487 = vunpack.c.l.b16 %v312
    %v1488 = vunpack.c.l.b16 %v313
    %v1489 = vunpack.c.l.b16 %v314
    %v1490 = vunpack.c.l.b16 %v315
    %v1491 = vunpack.c.l.b16 %v316
    %v1492 = vunpack.c.l.b16 %v317
    %v1493 = vunpack.c.l.b16 %v318
    %v1494 = vunpack.c.l.b16 %v319
    %v1495 = vunpack.c.l.b16 %v320
    %v1496 = vpack.c.b16 %v1465, %v1464
    %v1497 = vpack.c.b16 %v1467, %v1466
    %v1498 = vpack.c.b16 %v1469, %v1468
    %v1499 = vpack.c.b16 %v1471, %v1470
    %v1500 = vpack.c.b16 %v1473, %v1472
    %v1501 = vpack.c.b16 %v1475, %v1474
    %v1502 = vpack.c.b16 %v1477, %v1476
    %v1503 = vpack.c.b16 %v1479, %v1478
    %v1504 = vpack.c.b16 %v1481, %v1480
    %v1505 = vpack.c.b16 %v1483, %v1482
    %v1506 = vpack.c.b16 %v1485, %v1484
    %v1507 = vpack.c.b16 %v1487, %v1486
    %v1508 = vpack.c.b16 %v1489, %v1488
    %v1509 = vpack.c.b16 %v1491, %v1490
    %v1510 = vpack.c.b16 %v1493, %v1492
    %v1511 = vpack.c.b16 %v1495, %v1494
    %1528 = vmatpush.bf16.msra.mxu0 %v1503
    %1529 = vmatpush.bf16.msra.mxu0 %v1502
    %1530 = vmatpush.bf16.msra.mxu0 %v1501
    %1531 = vmatpush.bf16.msra.mxu0 %v1500
    %1532 = vmatpush.bf16.msra.mxu0 %v1499
    %1533 = vmatpush.bf16.msra.mxu0 %v1498
    %1534 = vmatpush.bf16.msra.mxu0 %v1497
    %1535 = vmatpush.bf16.msra.mxu0 %v1496
    %1536 = vmatmul.bf16.gmra.mxu0 %v1427
    %v1537 = vpop.f32.mrf.mxu0
    %v1538 = vadd.f32 %v1430, %v1537
    %v1539 = vpop.f32.mrf.mxu0
    %v1540 = vadd.f32 %v1430, %v1539
    %1541 = vdwg.mxu0
    %1542 = vmatpush.bf16.msra.mxu0 %v1511
    %1543 = vmatpush.bf16.msra.mxu0 %v1510
    %1544 = vmatpush.bf16.msra.mxu0 %v1509
    %1545 = vmatpush.bf16.msra.mxu0 %v1508
    %1546 = vmatpush.bf16.msra.mxu0 %v1507
    %1547 = vmatpush.bf16.msra.mxu0 %v1506
    %1548 = vmatpush.bf16.msra.mxu0 %v1505
    %1549 = vmatpush.bf16.msra.mxu0 %v1504
    %1550 = vmatmul.bf16.gmra.mxu0 %v1428
    %v1551 = vpop.f32.mrf.mxu0
    %v1552 = vadd.f32 %v1538, %v1551
    %v1553 = vpop.f32.mrf.mxu0
    %v1554 = vadd.f32 %v1540, %v1553
    %1555 = vdwg.mxu0
    %v1556 = vmul.f32 %v1552, 0.01
    %v1557 = vmul.f32 %v1554, 0.01
    %v1558 = vmax.f32 %v1552, %v1556
    %v1559 = vmax.f32 %v1554, %v1557
    %v1561 = vperm.slane %v386, 0
    %v1562 = vperm.slane %v386, 1
    %v1629 = vunpack.c.l.b16 %v322
    %v1630 = vunpack.c.h.b16 %v322
    %v1631 = vunpack.c.l.b16 %v323
    %v1632 = vunpack.c.h.b16 %v323
    %v1633 = vunpack.c.l.b16 %v324
    %v1634 = vunpack.c.h.b16 %v324
    %v1635 = vunpack.c.l.b16 %v325
    %v1636 = vunpack.c.h.b16 %v325
    %v1637 = vunpack.c.l.b16 %v326
    %v1638 = vunpack.c.h.b16 %v326
    %v1639 = vunpack.c.l.b16 %v327
    %v1640 = vunpack.c.h.b16 %v327
    %v1641 = vunpack.c.l.b16 %v328
    %v1642 = vunpack.c.h.b16 %v328
    %v1643 = vunpack.c.l.b16 %v329
    %v1644 = vunpack.c.h.b16 %v329
    %v1645 = vunpack.c.l.b16 %v330
    %v1646 = vunpack.c.h.b16 %v330
    %v1647 = vunpack.c.l.b16 %v331
    %v1648 = vunpack.c.h.b16 %v331
    %v1649 = vunpack.c.l.b16 %v332
    %v1650 = vunpack.c.h.b16 %v332
    %v1651 = vunpack.c.l.b16 %v333
    %v1652 = vunpack.c.h.b16 %v333
    %v1653 = vunpack.c.l.b16 %v334
    %v1654 = vunpack.c.h.b16 %v334
    %v1655 = vunpack.c.l.b16 %v335
    %v1656 = vunpack.c.h.b16 %v335
    %v1657 = vunpack.c.l.b16 %v336
    %v1658 = vunpack.c.h.b16 %v336
    %v1659 = vunpack.c.l.b16 %v337
    %v1660 = vunpack.c.h.b16 %v337
    %v1661 = vunpack.c.l.b16 %v338
    %v1662 = vunpack.c.h.b16 %v338
    %v1663 = vunpack.c.l.b16 %v339
    %v1664 = vunpack.c.h.b16 %v339
    %v1665 = vunpack.c.l.b16 %v340
    %v1666 = vunpack.c.h.b16 %v340
    %v1667 = vunpack.c.l.b16 %v341
    %v1668 = vunpack.c.h.b16 %v341
    %v1669 = vunpack.c.l.b16 %v342
    %v1670 = vunpack.c.h.b16 %v342
    %v1671 = vunpack.c.l.b16 %v343
    %v1672 = vunpack.c.h.b16 %v343
    %v1673 = vunpack.c.l.b16 %v344
    %v1674 = vunpack.c.h.b16 %v344
    %v1675 = vunpack.c.l.b16 %v345
    %v1676 = vunpack.c.h.b16 %v345
    %v1677 = vunpack.c.l.b16 %v346
    %v1678 = vunpack.c.h.b16 %v346
    %v1679 = vunpack.c.l.b16 %v347
    %v1680 = vunpack.c.h.b16 %v347
    %v1681 = vunpack.c.l.b16 %v348
    %v1682 = vunpack.c.h.b16 %v348
    %v1683 = vunpack.c.l.b16 %v349
    %v1684 = vunpack.c.h.b16 %v349
    %v1685 = vunpack.c.l.b16 %v350
    %v1686 = vunpack.c.h.b16 %v350
    %v1687 = vunpack.c.l.b16 %v351
    %v1688 = vunpack.c.h.b16 %v351
    %v1689 = vunpack.c.l.b16 %v352
    %v1690 = vunpack.c.h.b16 %v352
    %v1691 = vunpack.c.l.b16 %v353
    %v1692 = vunpack.c.h.b16 %v353
    %v1693 = vunpack.c.l.b16 %v354
    %v1694 = vunpack.c.h.b16 %v354
    %v1695 = vunpack.c.l.b16 %v355
    %v1696 = vunpack.c.h.b16 %v355
    %v1697 = vunpack.c.l.b16 %v356
    %v1698 = vunpack.c.h.b16 %v356
    %v1699 = vunpack.c.l.b16 %v357
    %v1700 = vunpack.c.h.b16 %v357
    %v1701 = vunpack.c.l.b16 %v358
    %v1702 = vunpack.c.h.b16 %v358
    %v1703 = vunpack.c.l.b16 %v359
    %v1704 = vunpack.c.h.b16 %v359
    %v1705 = vunpack.c.l.b16 %v360
    %v1706 = vunpack.c.h.b16 %v360
    %v1707 = vunpack.c.l.b16 %v361
    %v1708 = vunpack.c.h.b16 %v361
    %v1709 = vunpack.c.l.b16 %v362
    %v1710 = vunpack.c.h.b16 %v362
    %v1711 = vunpack.c.l.b16 %v363
    %v1712 = vunpack.c.h.b16 %v363
    %v1713 = vunpack.c.l.b16 %v364
    %v1714 = vunpack.c.h.b16 %v364
    %v1715 = vunpack.c.l.b16 %v365
    %v1716 = vunpack.c.h.b16 %v365
    %v1717 = vunpack.c.l.b16 %v366
    %v1718 = vunpack.c.h.b16 %v366
    %v1719 = vunpack.c.l.b16 %v367
    %v1720 = vunpack.c.h.b16 %v367
    %v1721 = vunpack.c.l.b16 %v368
    %v1722 = vunpack.c.h.b16 %v368
    %v1723 = vunpack.c.l.b16 %v369
    %v1724 = vunpack.c.h.b16 %v369
    %v1725 = vunpack.c.l.b16 %v370
    %v1726 = vunpack.c.h.b16 %v370
    %v1727 = vunpack.c.l.b16 %v371
    %v1728 = vunpack.c.h.b16 %v371
    %v1729 = vunpack.c.l.b16 %v372
    %v1730 = vunpack.c.h.b16 %v372
    %v1731 = vunpack.c.l.b16 %v373
    %v1732 = vunpack.c.h.b16 %v373
    %v1733 = vunpack.c.l.b16 %v374
    %v1734 = vunpack.c.h.b16 %v374
    %v1735 = vunpack.c.l.b16 %v375
    %v1736 = vunpack.c.h.b16 %v375
    %v1737 = vunpack.c.l.b16 %v376
    %v1738 = vunpack.c.h.b16 %v376
    %v1739 = vunpack.c.l.b16 %v377
    %v1740 = vunpack.c.h.b16 %v377
    %v1741 = vunpack.c.l.b16 %v378
    %v1742 = vunpack.c.h.b16 %v378
    %v1743 = vunpack.c.l.b16 %v379
    %v1744 = vunpack.c.h.b16 %v379
    %v1745 = vunpack.c.l.b16 %v380
    %v1746 = vunpack.c.h.b16 %v380
    %v1747 = vunpack.c.l.b16 %v381
    %v1748 = vunpack.c.h.b16 %v381
    %v1749 = vunpack.c.l.b16 %v382
    %v1750 = vunpack.c.h.b16 %v382
    %v1751 = vunpack.c.l.b16 %v383
    %v1752 = vunpack.c.h.b16 %v383
    %v1753 = vunpack.c.l.b16 %v384
    %v1754 = vunpack.c.h.b16 %v384
    %v1755 = vunpack.c.l.b16 %v385
    %v1756 = vunpack.c.h.b16 %v385
    %v1757 = vpack.c.b16 %v1631, %v1629
    %v1758 = vpack.c.b16 %v1632, %v1630
    %v1759 = vpack.c.b16 %v1635, %v1633
    %v1760 = vpack.c.b16 %v1636, %v1634
    %v1761 = vpack.c.b16 %v1639, %v1637
    %v1762 = vpack.c.b16 %v1640, %v1638
    %v1763 = vpack.c.b16 %v1643, %v1641
    %v1764 = vpack.c.b16 %v1644, %v1642
    %v1765 = vpack.c.b16 %v1647, %v1645
    %v1766 = vpack.c.b16 %v1648, %v1646
    %v1767 = vpack.c.b16 %v1651, %v1649
    %v1768 = vpack.c.b16 %v1652, %v1650
    %v1769 = vpack.c.b16 %v1655, %v1653
    %v1770 = vpack.c.b16 %v1656, %v1654
    %v1771 = vpack.c.b16 %v1659, %v1657
    %v1772 = vpack.c.b16 %v1660, %v1658
    %v1773 = vpack.c.b16 %v1663, %v1661
    %v1774 = vpack.c.b16 %v1664, %v1662
    %v1775 = vpack.c.b16 %v1667, %v1665
    %v1776 = vpack.c.b16 %v1668, %v1666
    %v1777 = vpack.c.b16 %v1671, %v1669
    %v1778 = vpack.c.b16 %v1672, %v1670
    %v1779 = vpack.c.b16 %v1675, %v1673
    %v1780 = vpack.c.b16 %v1676, %v1674
    %v1781 = vpack.c.b16 %v1679, %v1677
    %v1782 = vpack.c.b16 %v1680, %v1678
    %v1783 = vpack.c.b16 %v1683, %v1681
    %v1784 = vpack.c.b16 %v1684, %v1682
    %v1785 = vpack.c.b16 %v1687, %v1685
    %v1786 = vpack.c.b16 %v1688, %v1686
    %v1787 = vpack.c.b16 %v1691, %v1689
    %v1788 = vpack.c.b16 %v1692, %v1690
    %v1789 = vpack.c.b16 %v1695, %v1693
    %v1790 = vpack.c.b16 %v1696, %v1694
    %v1791 = vpack.c.b16 %v1699, %v1697
    %v1792 = vpack.c.b16 %v1700, %v1698
    %v1793 = vpack.c.b16 %v1703, %v1701
    %v1794 = vpack.c.b16 %v1704, %v1702
    %v1795 = vpack.c.b16 %v1707, %v1705
    %v1796 = vpack.c.b16 %v1708, %v1706
    %v1797 = vpack.c.b16 %v1711, %v1709
    %v1798 = vpack.c.b16 %v1712, %v1710
    %v1799 = vpack.c.b16 %v1715, %v1713
    %v1800 = vpack.c.b16 %v1716, %v1714
    %v1801 = vpack.c.b16 %v1719, %v1717
    %v1802 = vpack.c.b16 %v1720, %v1718
    %v1803 = vpack.c.b16 %v1723, %v1721
    %v1804 = vpack.c.b16 %v1724, %v1722
    %v1805 = vpack.c.b16 %v1727, %v1725
    %v1806 = vpack.c.b16 %v1728, %v1726
    %v1807 = vpack.c.b16 %v1731, %v1729
    %v1808 = vpack.c.b16 %v1732, %v1730
    %v1809 = vpack.c.b16 %v1735, %v1733
    %v1810 = vpack.c.b16 %v1736, %v1734
    %v1811 = vpack.c.b16 %v1739, %v1737
    %v1812 = vpack.c.b16 %v1740, %v1738
    %v1813 = vpack.c.b16 %v1743, %v1741
    %v1814 = vpack.c.b16 %v1744, %v1742
    %v1815 = vpack.c.b16 %v1747, %v1745
    %v1816 = vpack.c.b16 %v1748, %v1746
    %v1817 = vpack.c.b16 %v1751, %v1749
    %v1818 = vpack.c.b16 %v1752, %v1750
    %v1819 = vpack.c.b16 %v1755, %v1753
    %v1820 = vpack.c.b16 %v1756, %v1754
    %1885 = vmatpush.bf16.msra.mxu0 %v1771
    %1886 = vmatpush.bf16.msra.mxu0 %v1769
    %1887 = vmatpush.bf16.msra.mxu0 %v1767
    %1888 = vmatpush.bf16.msra.mxu0 %v1765
    %1889 = vmatpush.bf16.msra.mxu0 %v1763
    %1890 = vmatpush.bf16.msra.mxu0 %v1761
    %1891 = vmatpush.bf16.msra.mxu0 %v1759
    %1892 = vmatpush.bf16.msra.mxu0 %v1757
    %1893 = vmatmul.bf16.gmra.mxu0 %v978
    %v1894 = vpop.f32.mrf.mxu0
    %v1895 = vadd.f32 %v1561, %v1894
    %v1896 = vpop.f32.mrf.mxu0
    %v1897 = vadd.f32 %v1561, %v1896
    %1898 = vdwg.mxu0
    %1899 = vmatpush.bf16.msra.mxu0 %v1787
    %1900 = vmatpush.bf16.msra.mxu0 %v1785
    %1901 = vmatpush.bf16.msra.mxu0 %v1783
    %1902 = vmatpush.bf16.msra.mxu0 %v1781
    %1903 = vmatpush.bf16.msra.mxu0 %v1779
    %1904 = vmatpush.bf16.msra.mxu0 %v1777
    %1905 = vmatpush.bf16.msra.mxu0 %v1775
    %1906 = vmatpush.bf16.msra.mxu0 %v1773
    %1907 = vmatmul.bf16.gmra.mxu0 %v979
    %v1908 = vpop.f32.mrf.mxu0
    %v1909 = vadd.f32 %v1895, %v1908
    %v1910 = vpop.f32.mrf.mxu0
    %v1911 = vadd.f32 %v1897, %v1910
    %1912 = vdwg.mxu0
    %1913 = vmatpush.bf16.msra.mxu0 %v1803
    %1914 = vmatpush.bf16.msra.mxu0 %v1801
    %1915 = vmatpush.bf16.msra.mxu0 %v1799
    %1916 = vmatpush.bf16.msra.mxu0 %v1797
    %1917 = vmatpush.bf16.msra.mxu0 %v1795
    %1918 = vmatpush.bf16.msra.mxu0 %v1793
    %1919 = vmatpush.bf16.msra.mxu0 %v1791
    %1920 = vmatpush.bf16.msra.mxu0 %v1789
    %1921 = vmatmul.bf16.gmra.mxu0 %v980
    %v1922 = vpop.f32.mrf.mxu0
    %v1923 = vadd.f32 %v1909, %v1922
    %v1924 = vpop.f32.mrf.mxu0
    %v1925 = vadd.f32 %v1911, %v1924
    %1926 = vdwg.mxu0
    %1927 = vmatpush.bf16.msra.mxu0 %v1819
    %1928 = vmatpush.bf16.msra.mxu0 %v1817
    %1929 = vmatpush.bf16.msra.mxu0 %v1815
    %1930 = vmatpush.bf16.msra.mxu0 %v1813
    %1931 = vmatpush.bf16.msra.mxu0 %v1811
    %1932 = vmatpush.bf16.msra.mxu0 %v1809
    %1933 = vmatpush.bf16.msra.mxu0 %v1807
    %1934 = vmatpush.bf16.msra.mxu0 %v1805
    %1935 = vmatmul.bf16.gmra.mxu0 %v981
    %v1936 = vpop.f32.mrf.mxu0
    %v1937 = vadd.f32 %v1923, %v1936
    %v1938 = vpop.f32.mrf.mxu0
    %v1939 = vadd.f32 %v1925, %v1938
    %1940 = vdwg.mxu0
    %1941 = vmatpush.bf16.msra.mxu0 %v1772
    %1942 = vmatpush.bf16.msra.mxu0 %v1770
    %1943 = vmatpush.bf16.msra.mxu0 %v1768
    %1944 = vmatpush.bf16.msra.mxu0 %v1766
    %1945 = vmatpush.bf16.msra.mxu0 %v1764
    %1946 = vmatpush.bf16.msra.mxu0 %v1762
    %1947 = vmatpush.bf16.msra.mxu0 %v1760
    %1948 = vmatpush.bf16.msra.mxu0 %v1758
    %1949 = vmatmul.bf16.gmra.mxu0 %v978
    %v1950 = vpop.f32.mrf.mxu0
    %v1951 = vadd.f32 %v1562, %v1950
    %v1952 = vpop.f32.mrf.mxu0
    %v1953 = vadd.f32 %v1562, %v1952
    %1954 = vdwg.mxu0
    %1955 = vmatpush.bf16.msra.mxu0 %v1788
    %1956 = vmatpush.bf16.msra.mxu0 %v1786
    %1957 = vmatpush.bf16.msra.mxu0 %v1784
    %1958 = vmatpush.bf16.msra.mxu0 %v1782
    %1959 = vmatpush.bf16.msra.mxu0 %v1780
    %1960 = vmatpush.bf16.msra.mxu0 %v1778
    %1961 = vmatpush.bf16.msra.mxu0 %v1776
    %1962 = vmatpush.bf16.msra.mxu0 %v1774
    %1963 = vmatmul.bf16.gmra.mxu0 %v979
    %v1964 = vpop.f32.mrf.mxu0
    %v1965 = vadd.f32 %v1951, %v1964
    %v1966 = vpop.f32.mrf.mxu0
    %v1967 = vadd.f32 %v1953, %v1966
    %1968 = vdwg.mxu0
    %1969 = vmatpush.bf16.msra.mxu0 %v1804
    %1970 = vmatpush.bf16.msra.mxu0 %v1802
    %1971 = vmatpush.bf16.msra.mxu0 %v1800
    %1972 = vmatpush.bf16.msra.mxu0 %v1798
    %1973 = vmatpush.bf16.msra.mxu0 %v1796
    %1974 = vmatpush.bf16.msra.mxu0 %v1794
    %1975 = vmatpush.bf16.msra.mxu0 %v1792
    %1976 = vmatpush.bf16.msra.mxu0 %v1790
    %1977 = vmatmul.bf16.gmra.mxu0 %v980
    %v1978 = vpop.f32.mrf.mxu0
    %v1979 = vadd.f32 %v1965, %v1978
    %v1980 = vpop.f32.mrf.mxu0
    %v1981 = vadd.f32 %v1967, %v1980
    %1982 = vdwg.mxu0
    %1983 = vmatpush.bf16.msra.mxu0 %v1820
    %1984 = vmatpush.bf16.msra.mxu0 %v1818
    %1985 = vmatpush.bf16.msra.mxu0 %v1816
    %1986 = vmatpush.bf16.msra.mxu0 %v1814
    %1987 = vmatpush.bf16.msra.mxu0 %v1812
    %1988 = vmatpush.bf16.msra.mxu0 %v1810
    %1989 = vmatpush.bf16.msra.mxu0 %v1808
    %1990 = vmatpush.bf16.msra.mxu0 %v1806
    %1991 = vmatmul.bf16.gmra.mxu0 %v981
    %v1992 = vpop.f32.mrf.mxu0
    %v1993 = vadd.f32 %v1979, %v1992
    %v1994 = vpop.f32.mrf.mxu0
    %v1995 = vadd.f32 %v1981, %v1994
    %1996 = vdwg.mxu0
    %v1997 = vmul.f32 %v1937, 0.01
    %v1998 = vmul.f32 %v1993, 0.01
    %v1999 = vmul.f32 %v1939, 0.01
    %v2000 = vmul.f32 %v1995, 0.01
    %v2001 = vmax.f32 %v1937, %v1997
    %v2002 = vmax.f32 %v1993, %v1998
    %v2003 = vmax.f32 %v1939, %v1999
    %v2004 = vmax.f32 %v1995, %v2000
    %v2005 = vpack.c.bf16 %v2003, %v2001
    %v2006 = vpack.c.bf16 %v2004, %v2002
    %v2008 = vperm.slane %v419, 0
    %v2042 = vunpack.c.l.b16 %v387
    %v2043 = vunpack.c.l.b16 %v388
    %v2044 = vunpack.c.l.b16 %v389
    %v2045 = vunpack.c.l.b16 %v390
    %v2046 = vunpack.c.l.b16 %v391
    %v2047 = vunpack.c.l.b16 %v392
    %v2048 = vunpack.c.l.b16 %v393
    %v2049 = vunpack.c.l.b16 %v394
    %v2050 = vunpack.c.l.b16 %v395
    %v2051 = vunpack.c.l.b16 %v396
    %v2052 = vunpack.c.l.b16 %v397
    %v2053 = vunpack.c.l.b16 %v398
    %v2054 = vunpack.c.l.b16 %v399
    %v2055 = vunpack.c.l.b16 %v400
    %v2056 = vunpack.c.l.b16 %v401
    %v2057 = vunpack.c.l.b16 %v402
    %v2058 = vunpack.c.l.b16 %v403
    %v2059 = vunpack.c.l.b16 %v404
    %v2060 = vunpack.c.l.b16 %v405
    %v2061 = vunpack.c.l.b16 %v406
    %v2062 = vunpack.c.l.b16 %v407
    %v2063 = vunpack.c.l.b16 %v408
    %v2064 = vunpack.c.l.b16 %v409
    %v2065 = vunpack.c.l.b16 %v410
    %v2066 = vunpack.c.l.b16 %v411
    %v2067 = vunpack.c.l.b16 %v412
    %v2068 = vunpack.c.l.b16 %v413
    %v2069 = vunpack.c.l.b16 %v414
    %v2070 = vunpack.c.l.b16 %v415
    %v2071 = vunpack.c.l.b16 %v416
    %v2072 = vunpack.c.l.b16 %v417
    %v2073 = vunpack.c.l.b16 %v418
    %v2074 = vpack.c.b16 %v2043, %v2042
    %v2075 = vpack.c.b16 %v2045, %v2044
    %v2076 = vpack.c.b16 %v2047, %v2046
    %v2077 = vpack.c.b16 %v2049, %v2048
    %v2078 = vpack.c.b16 %v2051, %v2050
    %v2079 = vpack.c.b16 %v2053, %v2052
    %v2080 = vpack.c.b16 %v2055, %v2054
    %v2081 = vpack.c.b16 %v2057, %v2056
    %v2082 = vpack.c.b16 %v2059, %v2058
    %v2083 = vpack.c.b16 %v2061, %v2060
    %v2084 = vpack.c.b16 %v2063, %v2062
    %v2085 = vpack.c.b16 %v2065, %v2064
    %v2086 = vpack.c.b16 %v2067, %v2066
    %v2087 = vpack.c.b16 %v2069, %v2068
    %v2088 = vpack.c.b16 %v2071, %v2070
    %v2089 = vpack.c.b16 %v2073, %v2072
    %2106 = vmatpush.bf16.msra.mxu0 %v2081
    %2107 = vmatpush.bf16.msra.mxu0 %v2080
    %2108 = vmatpush.bf16.msra.mxu0 %v2079
    %2109 = vmatpush.bf16.msra.mxu0 %v2078
    %2110 = vmatpush.bf16.msra.mxu0 %v2077
    %2111 = vmatpush.bf16.msra.mxu0 %v2076
    %2112 = vmatpush.bf16.msra.mxu0 %v2075
    %2113 = vmatpush.bf16.msra.mxu0 %v2074
    %2114 = vmatmul.bf16.gmra.mxu0 %v2005
    %v2115 = vpop.f32.mrf.mxu0
    %v2116 = vadd.f32 %v2008, %v2115
    %v2117 = vpop.f32.mrf.mxu0
    %v2118 = vadd.f32 %v2008, %v2117
    %2119 = vdwg.mxu0
    %2120 = vmatpush.bf16.msra.mxu0 %v2089
    %2121 = vmatpush.bf16.msra.mxu0 %v2088
    %2122 = vmatpush.bf16.msra.mxu0 %v2087
    %2123 = vmatpush.bf16.msra.mxu0 %v2086
    %2124 = vmatpush.bf16.msra.mxu0 %v2085
    %2125 = vmatpush.bf16.msra.mxu0 %v2084
    %2126 = vmatpush.bf16.msra.mxu0 %v2083
    %2127 = vmatpush.bf16.msra.mxu0 %v2082
    %2128 = vmatmul.bf16.gmra.mxu0 %v2006
    %v2129 = vpop.f32.mrf.mxu0
    %v2130 = vadd.f32 %v2116, %v2129
    %v2131 = vpop.f32.mrf.mxu0
    %v2132 = vadd.f32 %v2118, %v2131
    %2133 = vdwg.mxu0
    %v2134 = vmul.f32 %v2130, 0.01
    %v2135 = vmul.f32 %v2132, 0.01
    %v2136 = vmax.f32 %v2130, %v2134
    %v2137 = vmax.f32 %v2132, %v2135
    %v2138 = vpack.c.bf16 %v1559, %v1558
    %v2139 = vpack.c.bf16 %v2137, %v2136
    %v2141 = vperm.slane %v452, 0
    %v2175 = vunpack.c.l.b16 %v420
    %v2176 = vunpack.c.l.b16 %v421
    %v2177 = vunpack.c.l.b16 %v422
    %v2178 = vunpack.c.l.b16 %v423
    %v2179 = vunpack.c.l.b16 %v424
    %v2180 = vunpack.c.l.b16 %v425
    %v2181 = vunpack.c.l.b16 %v426
    %v2182 = vunpack.c.l.b16 %v427
    %v2183 = vunpack.c.l.b16 %v428
    %v2184 = vunpack.c.l.b16 %v429
    %v2185 = vunpack.c.l.b16 %v430
    %v2186 = vunpack.c.l.b16 %v431
    %v2187 = vunpack.c.l.b16 %v432
    %v2188 = vunpack.c.l.b16 %v433
    %v2189 = vunpack.c.l.b16 %v434
    %v2190 = vunpack.c.l.b16 %v435
    %v2191 = vunpack.c.l.b16 %v436
    %v2192 = vunpack.c.l.b16 %v437
    %v2193 = vunpack.c.l.b16 %v438
    %v2194 = vunpack.c.l.b16 %v439
    %v2195 = vunpack.c.l.b16 %v440
    %v2196 = vunpack.c.l.b16 %v441
    %v2197 = vunpack.c.l.b16 %v442
    %v2198 = vunpack.c.l.b16 %v443
    %v2199 = vunpack.c.l.b16 %v444
    %v2200 = vunpack.c.l.b16 %v445
    %v2201 = vunpack.c.l.b16 %v446
    %v2202 = vunpack.c.l.b16 %v447
    %v2203 = vunpack.c.l.b16 %v448
    %v2204 = vunpack.c.l.b16 %v449
    %v2205 = vunpack.c.l.b16 %v450
    %v2206 = vunpack.c.l.b16 %v451
    %v2207 = vpack.c.b16 %v2176, %v2175
    %v2208 = vpack.c.b16 %v2178, %v2177
    %v2209 = vpack.c.b16 %v2180, %v2179
    %v2210 = vpack.c.b16 %v2182, %v2181
    %v2211 = vpack.c.b16 %v2184, %v2183
    %v2212 = vpack.c.b16 %v2186, %v2185
    %v2213 = vpack.c.b16 %v2188, %v2187
    %v2214 = vpack.c.b16 %v2190, %v2189
    %v2215 = vpack.c.b16 %v2192, %v2191
    %v2216 = vpack.c.b16 %v2194, %v2193
    %v2217 = vpack.c.b16 %v2196, %v2195
    %v2218 = vpack.c.b16 %v2198, %v2197
    %v2219 = vpack.c.b16 %v2200, %v2199
    %v2220 = vpack.c.b16 %v2202, %v2201
    %v2221 = vpack.c.b16 %v2204, %v2203
    %v2222 = vpack.c.b16 %v2206, %v2205
    %2239 = vmatpush.bf16.msra.mxu0 %v2214
    %2240 = vmatpush.bf16.msra.mxu0 %v2213
    %2241 = vmatpush.bf16.msra.mxu0 %v2212
    %2242 = vmatpush.bf16.msra.mxu0 %v2211
    %2243 = vmatpush.bf16.msra.mxu0 %v2210
    %2244 = vmatpush.bf16.msra.mxu0 %v2209
    %2245 = vmatpush.bf16.msra.mxu0 %v2208
    %2246 = vmatpush.bf16.msra.mxu0 %v2207
    %2247 = vmatmul.bf16.gmra.mxu0 %v2138
    %v2248 = vpop.f32.mrf.mxu0
    %v2249 = vadd.f32 %v2141, %v2248
    %v2250 = vpop.f32.mrf.mxu0
    %v2251 = vadd.f32 %v2141, %v2250
    %2252 = vdwg.mxu0
    %2253 = vmatpush.bf16.msra.mxu0 %v2222
    %2254 = vmatpush.bf16.msra.mxu0 %v2221
    %2255 = vmatpush.bf16.msra.mxu0 %v2220
    %2256 = vmatpush.bf16.msra.mxu0 %v2219
    %2257 = vmatpush.bf16.msra.mxu0 %v2218
    %2258 = vmatpush.bf16.msra.mxu0 %v2217
    %2259 = vmatpush.bf16.msra.mxu0 %v2216
    %2260 = vmatpush.bf16.msra.mxu0 %v2215
    %2261 = vmatmul.bf16.gmra.mxu0 %v2139
    %v2262 = vpop.f32.mrf.mxu0
    %v2263 = vadd.f32 %v2249, %v2262
    %v2264 = vpop.f32.mrf.mxu0
    %v2265 = vadd.f32 %v2251, %v2264
    %2266 = vdwg.mxu0
    %v2267 = vadd.f32 %v2263, %v455
    %v2268 = vadd.f32 %v2265, %v456
    %vm2269 = vcmask 15360
    %v2270 = vsel %vm2269, %v2267, -inf
    %2271 = vmax.xlane.f32.xlu0 %v2270
    %v2272 = vpop.xlane.xlu0 %2271
    %v2273 = vsel %vm2269, %v2268, -inf
    %2274 = vmax.xlane.f32.xlu0 %v2273
    %v2275 = vpop.xlane.xlu0 %2274
    %v2276 = vsub.f32 %v2267, %v2272
    %v2277 = vsub.f32 %v2268, %v2275
    %v2278 = vmul.f32 %v2276, 1.442695
    %v2279 = vpow.pop %v2278
    %v2280 = vmul.f32 %v2277, 1.442695
    %v2281 = vpow.pop %v2280
    %v2282 = vsel %vm2269, %v2279, 0.0
    %2283 = vadd.xlane.f32.xlu0 %v2282
    %v2284 = vpop.xlane.xlu0 %2283
    %v2285 = vsel %vm2269, %v2281, 0.0
    %2286 = vadd.xlane.f32.xlu0 %v2285
    %v2287 = vpop.xlane.xlu0 %2286
    %v2288 = vlog2.pop %v2284
    %v2289 = vmul.f32 %v2288, 0.6931472
    %v2290 = vlog2.pop %v2287
    %v2291 = vmul.f32 %v2290, 0.6931472
    %v2292 = vadd.f32 %v2289, %v2272
    %v2293 = vadd.f32 %v2291, %v2275
    %v2294 = vsub.f32 %v2267, %v2292
    %v2295 = vsub.f32 %v2268, %v2293
    %v2296 = vmul.f32 %v2294, 1.442695
    %v2297 = vpow.pop %v2296
    %v2298 = vmul.f32 %v2295, 1.442695
    %v2299 = vpow.pop %v2298
    %v2300 = vmax.f32 %v2294, -3.4028235e+38
    %v2301 = vmax.f32 %v2295, -3.4028235e+38
    %v2302 = vmul.f32 %v2300, %v2297
    %v2303 = vmul.f32 %v2301, %v2299
    %v2304 = vsel %vm2269, %v2302, 0.0
    %2305 = vadd.xlane.f32.xlu0 %v2304
    %v2306 = vpop.xlane.xlu0 %2305
    %v2307 = vsel %vm2269, %v2303, 0.0
    %2308 = vadd.xlane.f32.xlu0 %v2307
    %v2309 = vpop.xlane.xlu0 %2308
    %v2310 = vsub.f32 0.0, %v2306
    %v2311 = vsub.f32 0.0, %v2309
    %2314 = vrot.lane.b32.xlu0 %v2263, 1
    %v2315 = vpop.permute.xlu0 %2314
    %2316 = vrot.lane.b32.xlu0 %v2265, 1
    %v2317 = vpop.permute.xlu0 %2316
    %v2320 = vsel %vm2269, %v2294, %v2310
    %v2321 = vsel %vm2269, %v2295, %v2311
    %vm2322 = vcmask 23552
    %v2323 = vsel %vm2322, %v2320, %v2315
    %v2324 = vsel %vm2322, %v2321, %v2317
    %vm2325 = vcmask 31744
    %2326 = vst.msk [vmem:[%s16] sm:$0xff] %vm2325, %v2323
    %2327 = vst.msk [vmem:[%s16 + $0x8] sm:$0xff] %vm2325, %v2324
    // Predicated region
    $region94: #{tpu_custom_call.1} parent=1 // pred_check
      _
    $region95: #{tpu_custom_call.1} parent=1 // pred_check_branch
      %2329 = sbr.rel (0) target = $region97
    $region96: #{tpu_custom_call.1} parent=1 // pred_region
      _
    $region97: #{tpu_custom_call.1} parent=1 // pred_fallthru
      _
    // Predicated region
    $region98: #{tpu_custom_call.1} parent=1 // pred_check
      _
    $region99: #{tpu_custom_call.1} parent=1 // pred_check_branch
      %2331 = sbr.rel (0) target = $region101
    $region100: #{tpu_custom_call.1} parent=1 // pred_region
      _
    $region101: #{tpu_custom_call.1} parent=1 // pred_fallthru
      _
    %2332 = vsyncpa [#allocation3], 1
    %2333 = vsyncpa [#allocation5], 1
    %2334 = vsyncpa [#allocation8], 1
    %2335 = vsyncpa [#allocation11], 1

</llo_original>
